<compile_context>
chip_gen: v5e
topology: v5e:2x2
jax: 0.10.0
libtpu: 0.0.40
codegen_flags: <defaults>
</compile_context>

<pallas_src>
import math
import functools

import jax
import jax.numpy as jnp
from jax import lax
from jax.experimental import pallas as pl
from jax.experimental.pallas import tpu as pltpu


def _round_up(x, m):
    return ((x + m - 1) // m) * m


# ----------------------------------------------------------------------------
# Fused kernel: 3x3 conv (im2col) + ReLU + combined cls/bbox head + box decode
#               + clip-to-image + small-box mask + sigmoid(objectness)
# ----------------------------------------------------------------------------
def fused_rpn_kernel(x_ref, wconv_ref, bconv_ref, whead_ref, bhead_ref,
                     geom_ref, out_ref, patch_scr, *,
                     num_anchors, reg_weights, bbox_xform_clip,
                     img_h, img_w, min_size):
    # x_ref:     (1, H, W, Cin) f32   one image, NHWC
    # wconv_ref: (9*Cin, Cin)   bf16  conv weight, rows ordered (kh, kw, ci)
    # bconv_ref: (1, Cin)       f32
    # whead_ref: (Cin, CP)      bf16  cols [dx(A), dy(A), dw(A), dh(A), obj(A), 0-pad]
    # bhead_ref: (1, CP)        f32
    # geom_ref:  (H*W, 4*A)     f32   cols [ctr_x(A), ctr_y(A), w(A), h(A)]
    # out_ref:   (1, H*W, CP)   f32   cols [x1(A), y1(A), x2(A), y2(A), score(A), 0-pad]
    # patch_scr: (H, W, 9*Cin)  bf16  im2col scratch
    A = num_anchors
    _, H, W, Cin = x_ref.shape
    HW = H * W
    CP = out_ref.shape[2]

    x = x_ref[0].astype(jnp.bfloat16)                       # (H, W, Cin)

    # --- im2col with zero halo handled in VMEM (no host-side pad) ------------
    # Zero every step so the boundary strips are correct on every core even
    # when the batch grid is split across TensorCores ("parallel").
    patch_scr[...] = jnp.zeros(patch_scr.shape, patch_scr.dtype)
    for kh in range(3):
        for kw in range(3):
            roff, coff = kh - 1, kw - 1
            oi0, oi1 = max(0, -roff), min(H, H - roff)
            oj0, oj1 = max(0, -coff), min(W, W - coff)
            idx = kh * 3 + kw
            patch_scr[oi0:oi1, oj0:oj1, idx * Cin:(idx + 1) * Cin] = \
                x[oi0 + roff:oi1 + roff, oj0 + coff:oj1 + coff, :]

    patch = patch_scr[...].reshape(HW, 9 * Cin)             # (HW, 9*Cin) bf16

    # --- 3x3 conv as a single MXU matmul (contraction = 9*Cin) + ReLU (f32) --
    hidden = jnp.dot(patch, wconv_ref[...], preferred_element_type=jnp.float32)
    hidden = jnp.maximum(hidden + bconv_ref[...], 0.0)

    # --- single 128-wide head matmul: objectness + bbox deltas together ------
    head = jnp.dot(hidden.astype(jnp.bfloat16), whead_ref[...],
                   preferred_element_type=jnp.float32) + bhead_ref[...]

    # --- box-coder decode + clip + small-box mask + sigmoid ------------------
    wx, wy, ww, wh = reg_weights
    dx = head[:, 0 * A:1 * A] / wx
    dy = head[:, 1 * A:2 * A] / wy
    dw = jnp.minimum(head[:, 2 * A:3 * A] / ww, bbox_xform_clip)
    dh = jnp.minimum(head[:, 3 * A:4 * A] / wh, bbox_xform_clip)
    obj = head[:, 4 * A:5 * A]

    ctr_x = geom_ref[:, 0 * A:1 * A]
    ctr_y = geom_ref[:, 1 * A:2 * A]
    widths = geom_ref[:, 2 * A:3 * A]
    heights = geom_ref[:, 3 * A:4 * A]

    pred_ctr_x = dx * widths + ctr_x
    pred_ctr_y = dy * heights + ctr_y
    pred_w = jnp.exp(dw) * widths
    pred_h = jnp.exp(dh) * heights

    x1 = jnp.clip(pred_ctr_x - 0.5 * pred_w, 0.0, float(img_w))
    y1 = jnp.clip(pred_ctr_y - 0.5 * pred_h, 0.0, float(img_h))
    x2 = jnp.clip(pred_ctr_x + 0.5 * pred_w, 0.0, float(img_w))
    y2 = jnp.clip(pred_ctr_y + 0.5 * pred_h, 0.0, float(img_h))

    keep = ((x2 - x1) >= min_size) & ((y2 - y1) >= min_size)
    score = jnp.where(keep, jax.nn.sigmoid(obj), -1.0)      # removed boxes: -1

    pieces = [x1, y1, x2, y2, score]
    pad_cols = CP - 5 * A
    if pad_cols > 0:
        pieces.append(jnp.zeros((HW, pad_cols), jnp.float32))
    out_ref[0] = jnp.concatenate(pieces, axis=1)            # one 128-lane store


def fused_rpn_pallas(x_nhwc, w_conv9, b_conv, w_head, b_head, anchor_geom, *,
                     num_anchors, reg_weights, bbox_xform_clip,
                     img_h, img_w, min_size):
    N, H, W, Cin = x_nhwc.shape
    HW = H * W
    CP = w_head.shape[1]
    A = num_anchors

    kern = functools.partial(
        fused_rpn_kernel, num_anchors=A, reg_weights=reg_weights,
        bbox_xform_clip=bbox_xform_clip, img_h=img_h, img_w=img_w,
        min_size=min_size)

    return pl.pallas_call(
        kern,
        out_shape=jax.ShapeDtypeStruct((N, HW, CP), jnp.float32),
        grid_spec=pltpu.PrefetchScalarGridSpec(
            num_scalar_prefetch=0,
            grid=(N,),
            in_specs=[
                pl.BlockSpec((1, H, W, Cin), lambda n: (n, 0, 0, 0)),
                pl.BlockSpec((9 * Cin, Cin), lambda n: (0, 0)),
                pl.BlockSpec((1, Cin), lambda n: (0, 0)),
                pl.BlockSpec((Cin, CP), lambda n: (0, 0)),
                pl.BlockSpec((1, CP), lambda n: (0, 0)),
                pl.BlockSpec((HW, 4 * A), lambda n: (0, 0)),
            ],
            out_specs=pl.BlockSpec((1, HW, CP), lambda n: (n, 0, 0)),
            scratch_shapes=[pltpu.VMEM((H, W, 9 * Cin), jnp.bfloat16)],
        ),
        compiler_params=pltpu.CompilerParams(
            dimension_semantics=("parallel",)),
    )(x_nhwc, w_conv9, b_conv, w_head, b_head, anchor_geom)


# ----------------------------------------------------------------------------
# Plain-JAX glue: anchor geometry, pre-NMS top-k + greedy NMS + top-n
# ----------------------------------------------------------------------------
def anchor_geometry(feat_h, feat_w, stride_h, stride_w, sizes, aspect_ratios):
    """(H*W, 4*A) columns: [ctr_x(A), ctr_y(A), width(A), height(A)]."""
    scales = jnp.asarray(sizes, jnp.float32)
    ratios = jnp.asarray(aspect_ratios, jnp.float32)
    h_ratios = jnp.sqrt(ratios)
    w_ratios = 1.0 / h_ratios
    ws = (w_ratios[:, None] * scales[None, :]).reshape(-1)       # (A,)
    hs = (h_ratios[:, None] * scales[None, :]).reshape(-1)       # (A,)
    shifts_x = jnp.arange(feat_w, dtype=jnp.float32) * stride_w
    shifts_y = jnp.arange(feat_h, dtype=jnp.float32) * stride_h
    sy, sx = jnp.meshgrid(shifts_y, shifts_x, indexing="ij")
    sx = sx.reshape(-1)
    sy = sy.reshape(-1)                                          # (H*W,)
    A = ws.shape[0]
    HW = feat_h * feat_w
    return jnp.concatenate([
        jnp.broadcast_to(sx[:, None], (HW, A)),
        jnp.broadcast_to(sy[:, None], (HW, A)),
        jnp.broadcast_to(ws[None, :], (HW, A)),
        jnp.broadcast_to(hs[None, :], (HW, A)),
    ], axis=1)


def nms_topn_single(boxes, scores, iou_thresh, pre_nms_top_n, top_n):
    # boxes: (K, 4), scores: (K,) ; scores < 0 mark removed small boxes.
    top_scores, top_idx = lax.top_k(scores, pre_nms_top_n)      # descending
    boxes_s = boxes[top_idx]
    valid = top_scores >= 0.0

    x1, y1, x2, y2 = boxes_s[:, 0], boxes_s[:, 1], boxes_s[:, 2], boxes_s[:, 3]
    area = (x2 - x1) * (y2 - y1)
    xx1 = jnp.maximum(x1[:, None], x1[None, :])
    yy1 = jnp.maximum(y1[:, None], y1[None, :])
    xx2 = jnp.minimum(x2[:, None], x2[None, :])
    yy2 = jnp.minimum(y2[:, None], y2[None, :])
    inter = jnp.clip(xx2 - xx1, 0.0) * jnp.clip(yy2 - yy1, 0.0)
    union = area[:, None] + area[None, :] - inter
    iou = inter / jnp.maximum(union, 1e-9)

    idx = jnp.arange(pre_nms_top_n)

    def body(i, keep):
        active = keep[i] & valid[i]
        suppress = active & (iou[i] > iou_thresh) & (idx > i)
        return keep & ~suppress

    keep = lax.fori_loop(0, pre_nms_top_n, body, valid)
    final_scores = jnp.where(keep, top_scores, -jnp.inf)
    # TODO(synk): PyTorch returns a variable number of boxes per image; here the
    # output is padded to exactly top_n rows (lowest-score survivors fill in).
    _, sel = lax.top_k(final_scores, top_n)
    return boxes_s[sel]


# ----------------------------------------------------------------------------
# Module wrapper
# ----------------------------------------------------------------------------
class RegionProposalNetworkPallas:
    def __init__(self, in_channels, anchor_sizes, aspect_ratios,
                 bbox_reg_weights, min_size, nms_thresh,
                 top_n_train, top_n_test, key, pre_nms_top_n=None):
        self.in_channels = in_channels
        self.anchor_sizes = anchor_sizes
        self.aspect_ratios = aspect_ratios
        self.bbox_reg_weights = bbox_reg_weights
        self.bbox_xform_clip = math.log(1000.0 / 16)
        self.min_size = float(min_size)
        self.nms_thresh = float(nms_thresh)
        self.top_n_train = top_n_train
        self.top_n_test = top_n_test
        self.pre_nms_top_n = pre_nms_top_n
        self.training = False

        A = len(anchor_sizes) * len(aspect_ratios)
        self.num_anchors = A
        C = in_channels
        CP = _round_up(5 * A, 128)
        self.head_cols = CP

        k_conv, k_box, k_cls = jax.random.split(key, 3)
        s = 0.05
        # Conv weight in (kh, kw, Cin, Cout) order, reshaped for im2col.
        # TODO(synk): importing a PyTorch RPNHead checkpoint requires an
        # explicit permutation into this (kh, kw, ci) / coord-major-column
        # layout; here weights are randomly initialized.
        w_conv = jax.random.normal(k_conv, (3, 3, C, C), jnp.float32) * s
        self.w_conv9 = w_conv.reshape(9 * C, C).astype(jnp.bfloat16)
        self.b_conv = jnp.zeros((1, C), jnp.float32)

        # Combined head: columns [dx(A), dy(A), dw(A), dh(A), obj(A)], padded
        # with zero columns to CP so the head matmul is 128-lane wide.
        w_box = jax.random.normal(k_box, (C, 4 * A), jnp.float32) * s
        w_cls = jax.random.normal(k_cls, (C, A), jnp.float32) * s
        w_head = jnp.concatenate([w_box, w_cls], axis=1)         # (C, 5A)
        self.w_head = jnp.pad(
            w_head, ((0, 0), (0, CP - 5 * A))).astype(jnp.bfloat16)
        self.b_head = jnp.zeros((1, CP), jnp.float32)

    def top_n(self):
        return self.top_n_train if self.training else self.top_n_test

    def forward(self, images, features_nchw):
        # images: (N, 3, img_H, img_W) NCHW, features: (N, C, H, W) NCHW
        N, C, H, W = features_nchw.shape
        img_h, img_w = int(images.shape[-2]), int(images.shape[-1])
        # TODO(synk): clips to the padded batch image size; torchvision clips
        # to each image's original (pre-padding) size from ImageList.
        A = self.num_anchors
        K = H * W * A

        # --- anchor geometry (glue; tiny, read once by the kernel) ---
        stride_h = float(img_h // H)
        stride_w = float(img_w // W)
        geom = anchor_geometry(H, W, stride_h, stride_w,
                               self.anchor_sizes, self.aspect_ratios)

        # --- fused head + decode (Pallas) ---
        x_nhwc = jnp.transpose(features_nchw, (0, 2, 3, 1))
        out = fused_rpn_pallas(
            x_nhwc, self.w_conv9, self.b_conv, self.w_head, self.b_head, geom,
            num_anchors=A, reg_weights=self.bbox_reg_weights,
            bbox_xform_clip=self.bbox_xform_clip,
            img_h=img_h, img_w=img_w, min_size=self.min_size)   # (N, H*W, CP)

        # Unpack lane-dense kernel output into (N, K, 4) boxes + (N, K) scores
        # with k = (h*W + w)*A + a, matching the reference convert()/anchors.
        head5 = out[:, :, :5 * A].reshape(N, H * W, 5, A)
        head5 = jnp.transpose(head5, (0, 1, 3, 2)).reshape(N, K, 5)
        proposals = head5[..., :4]
        scores = head5[..., 4]

        # --- pre-NMS top-k, greedy NMS, top-n per image (glue) ---
        pre_nms = self.pre_nms_top_n if self.pre_nms_top_n is not None else K
        pre_nms = max(min(pre_nms, K), self.top_n())
        filtered = jax.vmap(
            lambda b, s: nms_topn_single(b, s, self.nms_thresh,
                                         pre_nms, self.top_n())
        )(proposals, scores)                                    # (N, top_n, 4)

        # TODO(synk): training branch (Matcher / Balanced_Sampler / BCE +
        # smooth-L1 losses) is not implemented; inference path only.
        rpn_cls_loss, rpn_loc_loss = None, None
        return filtered, rpn_cls_loss, rpn_loc_loss


# ----------------------------------------------------------------------------
if __name__ == "__main__":
    key = jax.random.PRNGKey(0)
    k_img, k_feat, k_params = jax.random.split(key, 3)

    N, C, H, W = 2, 32, 8, 8
    img_h, img_w = 64, 64

    images = jax.random.normal(k_img, (N, 3, img_h, img_w), jnp.float32)
    features = jax.random.normal(k_feat, (N, C, H, W), jnp.float32)

    rpn = RegionProposalNetworkPallas(
        in_channels=C,
        anchor_sizes=(16.0,),
        aspect_ratios=(0.5, 1.0, 2.0),
        bbox_reg_weights=(1.0, 1.0, 1.0, 1.0),
        min_size=1.0,
        nms_thresh=0.7,
        top_n_train=16,
        top_n_test=8,
        key=k_params,
        pre_nms_top_n=128,
    )

    proposals, cls_loss, loc_loss = rpn.forward(images, features)
    proposals = jax.block_until_ready(proposals)

    assert proposals.shape == (N, rpn.top_n_test, 4), proposals.shape
    assert bool(jnp.all(jnp.isfinite(proposals)))
    assert bool(jnp.all(proposals[..., 2] >= proposals[..., 0]))
    assert bool(jnp.all(proposals[..., 3] >= proposals[..., 1]))
    print("KERNEL_OK")
</pallas_src>

<mosaic_0001>
module attributes {stable_mosaic.version = 11 : i64} {
  func.func @fused_rpn_kernel(%arg0: i32, %arg1: memref<1x8x8x32xf32, #tpu.memory_space<vmem>>, %arg2: memref<288x32xbf16, #tpu.memory_space<vmem>>, %arg3: memref<1x32xf32, #tpu.memory_space<vmem>>, %arg4: memref<32x128xbf16, #tpu.memory_space<vmem>>, %arg5: memref<1x128xf32, #tpu.memory_space<vmem>>, %arg6: memref<64x12xf32, #tpu.memory_space<vmem>>, %arg7: memref<1x64x128xf32, #tpu.memory_space<vmem>>, %arg8: memref<8x8x288xbf16, #tpu.memory_space<vmem>>) attributes {dimension_semantics = [#tpu.dimension_semantics<parallel>], iteration_bounds = array<i64: 2>, scalar_prefetch = 0 : i64, scratch_operands = 1 : i64, tpu.core_type = #tpu.core_type<tc>, window_params = [{transform_indices = @transform_0, window_bounds = array<i64: 1, 8, 8, 32>}, {pipeline_mode = #tpu.pipeline_mode<synchronous>, transform_indices = @transform_1, window_bounds = array<i64: 288, 32>}, {pipeline_mode = #tpu.pipeline_mode<synchronous>, transform_indices = @transform_2, window_bounds = array<i64: 1, 32>}, {pipeline_mode = #tpu.pipeline_mode<synchronous>, transform_indices = @transform_3, window_bounds = array<i64: 32, 128>}, {pipeline_mode = #tpu.pipeline_mode<synchronous>, transform_indices = @transform_4, window_bounds = array<i64: 1, 128>}, {pipeline_mode = #tpu.pipeline_mode<synchronous>, transform_indices = @transform_5, window_bounds = array<i64: 64, 12>}, {transform_indices = @transform_6, window_bounds = array<i64: 1, 64, 128>}]} {
    %c0 = arith.constant 0 : index
    %c0_0 = arith.constant 0 : index
    %c0_1 = arith.constant 0 : index
    %c0_2 = arith.constant 0 : index
    %0 = vector.load %arg1[%c0, %c0_0, %c0_1, %c0_2] : memref<1x8x8x32xf32, #tpu.memory_space<vmem>>, vector<1x8x8x32xf32>
    %1 = vector.shape_cast %0 : vector<1x8x8x32xf32> to vector<8x8x32xf32>
    %2 = arith.truncf %1 : vector<8x8x32xf32> to vector<8x8x32xbf16>
    %cst = arith.constant 0.000000e+00 : bf16
    %3 = vector.broadcast %cst : bf16 to vector<8x8x288xbf16>
    %c0_3 = arith.constant 0 : index
    %c0_4 = arith.constant 0 : index
    %c0_5 = arith.constant 0 : index
    %4 = vector.load %arg8[%c0_3, %c0_4, %c0_5] : memref<8x8x288xbf16, #tpu.memory_space<vmem>>, vector<8x8x288xbf16>
    tpu.vector_store %arg8[%c0_3, %c0_4, %c0_5], %3 {strides = array<i32>} : memref<8x8x288xbf16, #tpu.memory_space<vmem>>, vector<8x8x288xbf16>,
    %5 = vector.extract_strided_slice %2 {offsets = [0, 0, 0], sizes = [7, 7, 32], strides = [1, 1, 1]} : vector<8x8x32xbf16> to vector<7x7x32xbf16>
    %c1 = arith.constant 1 : index
    %c1_6 = arith.constant 1 : index
    %c0_7 = arith.constant 0 : index
    %6 = vector.load %arg8[%c1, %c1_6, %c0_7] : memref<8x8x288xbf16, #tpu.memory_space<vmem>>, vector<7x7x32xbf16>
    tpu.vector_store %arg8[%c1, %c1_6, %c0_7], %5 {strides = array<i32>} : memref<8x8x288xbf16, #tpu.memory_space<vmem>>, vector<7x7x32xbf16>,
    %7 = vector.extract_strided_slice %2 {offsets = [0, 0, 0], sizes = [7, 8, 32], strides = [1, 1, 1]} : vector<8x8x32xbf16> to vector<7x8x32xbf16>
    %c1_8 = arith.constant 1 : index
    %c0_9 = arith.constant 0 : index
    %c32 = arith.constant 32 : index
    %8 = vector.load %arg8[%c1_8, %c0_9, %c32] : memref<8x8x288xbf16, #tpu.memory_space<vmem>>, vector<7x8x32xbf16>
    tpu.vector_store %arg8[%c1_8, %c0_9, %c32], %7 {strides = array<i32>} : memref<8x8x288xbf16, #tpu.memory_space<vmem>>, vector<7x8x32xbf16>,
    %9 = vector.extract_strided_slice %2 {offsets = [0, 1, 0], sizes = [7, 7, 32], strides = [1, 1, 1]} : vector<8x8x32xbf16> to vector<7x7x32xbf16>
    %c1_10 = arith.constant 1 : index
    %c0_11 = arith.constant 0 : index
    %c64 = arith.constant 64 : index
    %10 = vector.load %arg8[%c1_10, %c0_11, %c64] : memref<8x8x288xbf16, #tpu.memory_space<vmem>>, vector<7x7x32xbf16>
    tpu.vector_store %arg8[%c1_10, %c0_11, %c64], %9 {strides = array<i32>} : memref<8x8x288xbf16, #tpu.memory_space<vmem>>, vector<7x7x32xbf16>,
    %11 = vector.extract_strided_slice %2 {offsets = [0, 0, 0], sizes = [8, 7, 32], strides = [1, 1, 1]} : vector<8x8x32xbf16> to vector<8x7x32xbf16>
    %c0_12 = arith.constant 0 : index
    %c1_13 = arith.constant 1 : index
    %c96 = arith.constant 96 : index
    %12 = vector.load %arg8[%c0_12, %c1_13, %c96] : memref<8x8x288xbf16, #tpu.memory_space<vmem>>, vector<8x7x32xbf16>
    tpu.vector_store %arg8[%c0_12, %c1_13, %c96], %11 {strides = array<i32>} : memref<8x8x288xbf16, #tpu.memory_space<vmem>>, vector<8x7x32xbf16>,
    %c0_14 = arith.constant 0 : index
    %c0_15 = arith.constant 0 : index
    %c128 = arith.constant 128 : index
    %13 = vector.load %arg8[%c0_14, %c0_15, %c128] : memref<8x8x288xbf16, #tpu.memory_space<vmem>>, vector<8x8x32xbf16>
    tpu.vector_store %arg8[%c0_14, %c0_15, %c128], %2 {strides = array<i32>} : memref<8x8x288xbf16, #tpu.memory_space<vmem>>, vector<8x8x32xbf16>,
    %14 = vector.extract_strided_slice %2 {offsets = [0, 1, 0], sizes = [8, 7, 32], strides = [1, 1, 1]} : vector<8x8x32xbf16> to vector<8x7x32xbf16>
    %c0_16 = arith.constant 0 : index
    %c0_17 = arith.constant 0 : index
    %c160 = arith.constant 160 : index
    %15 = vector.load %arg8[%c0_16, %c0_17, %c160] : memref<8x8x288xbf16, #tpu.memory_space<vmem>>, vector<8x7x32xbf16>
    tpu.vector_store %arg8[%c0_16, %c0_17, %c160], %14 {strides = array<i32>} : memref<8x8x288xbf16, #tpu.memory_space<vmem>>, vector<8x7x32xbf16>,
    %16 = vector.extract_strided_slice %2 {offsets = [1, 0, 0], sizes = [7, 7, 32], strides = [1, 1, 1]} : vector<8x8x32xbf16> to vector<7x7x32xbf16>
    %c0_18 = arith.constant 0 : index
    %c1_19 = arith.constant 1 : index
    %c192 = arith.constant 192 : index
    %17 = vector.load %arg8[%c0_18, %c1_19, %c192] : memref<8x8x288xbf16, #tpu.memory_space<vmem>>, vector<7x7x32xbf16>
    tpu.vector_store %arg8[%c0_18, %c1_19, %c192], %16 {strides = array<i32>} : memref<8x8x288xbf16, #tpu.memory_space<vmem>>, vector<7x7x32xbf16>,
    %18 = vector.extract_strided_slice %2 {offsets = [1, 0, 0], sizes = [7, 8, 32], strides = [1, 1, 1]} : vector<8x8x32xbf16> to vector<7x8x32xbf16>
    %c0_20 = arith.constant 0 : index
    %c0_21 = arith.constant 0 : index
    %c224 = arith.constant 224 : index
    %19 = vector.load %arg8[%c0_20, %c0_21, %c224] : memref<8x8x288xbf16, #tpu.memory_space<vmem>>, vector<7x8x32xbf16>
    tpu.vector_store %arg8[%c0_20, %c0_21, %c224], %18 {strides = array<i32>} : memref<8x8x288xbf16, #tpu.memory_space<vmem>>, vector<7x8x32xbf16>,
    %20 = vector.extract_strided_slice %2 {offsets = [1, 1, 0], sizes = [7, 7, 32], strides = [1, 1, 1]} : vector<8x8x32xbf16> to vector<7x7x32xbf16>
    %c0_22 = arith.constant 0 : index
    %c0_23 = arith.constant 0 : index
    %c256 = arith.constant 256 : index
    %21 = vector.load %arg8[%c0_22, %c0_23, %c256] : memref<8x8x288xbf16, #tpu.memory_space<vmem>>, vector<7x7x32xbf16>
    tpu.vector_store %arg8[%c0_22, %c0_23, %c256], %20 {strides = array<i32>} : memref<8x8x288xbf16, #tpu.memory_space<vmem>>, vector<7x7x32xbf16>,
    %c0_24 = arith.constant 0 : index
    %c0_25 = arith.constant 0 : index
    %c0_26 = arith.constant 0 : index
    %22 = vector.load %arg8[%c0_24, %c0_25, %c0_26] : memref<8x8x288xbf16, #tpu.memory_space<vmem>>, vector<8x8x288xbf16>
    %23 = vector.shape_cast %22 : vector<8x8x288xbf16> to vector<64x288xbf16>
    %c0_27 = arith.constant 0 : index
    %c0_28 = arith.constant 0 : index
    %24 = vector.load %arg2[%c0_27, %c0_28] : memref<288x32xbf16, #tpu.memory_space<vmem>>, vector<288x32xbf16>
    %cst_29 = arith.constant dense<0.000000e+00> : vector<64x32xf32>
    %25 = tpu.matmul %23, %24, %cst_29 {dimension_numbers = #tpu.dot_dimension_numbers<[1], [0], [0], [1], [0, 0, 1, 1], [], []>} : vector<64x288xbf16>, vector<288x32xbf16>, vector<64x32xf32> -> vector<64x32xf32>
    %c0_30 = arith.constant 0 : index
    %c0_31 = arith.constant 0 : index
    %26 = vector.load %arg3[%c0_30, %c0_31] : memref<1x32xf32, #tpu.memory_space<vmem>>, vector<1x32xf32>
    %27 = vector.broadcast %26 : vector<1x32xf32> to vector<64x32xf32>
    %28 = arith.addf %25, %27 : vector<64x32xf32>
    %cst_32 = arith.constant 0.000000e+00 : f32
    %29 = vector.broadcast %cst_32 : f32 to vector<64x32xf32>
    %30 = arith.maximumf %28, %29 : vector<64x32xf32>
    %31 = arith.truncf %30 : vector<64x32xf32> to vector<64x32xbf16>
    %c0_33 = arith.constant 0 : index
    %c0_34 = arith.constant 0 : index
    %32 = vector.load %arg4[%c0_33, %c0_34] : memref<32x128xbf16, #tpu.memory_space<vmem>>, vector<32x128xbf16>
    %cst_35 = arith.constant dense<0.000000e+00> : vector<64x128xf32>
    %33 = tpu.matmul %31, %32, %cst_35 {dimension_numbers = #tpu.dot_dimension_numbers<[1], [0], [0], [1], [0, 0, 1, 1], [], []>} : vector<64x32xbf16>, vector<32x128xbf16>, vector<64x128xf32> -> vector<64x128xf32>
    %c0_36 = arith.constant 0 : index
    %c0_37 = arith.constant 0 : index
    %34 = vector.load %arg5[%c0_36, %c0_37] : memref<1x128xf32, #tpu.memory_space<vmem>>, vector<1x128xf32>
    %35 = vector.broadcast %34 : vector<1x128xf32> to vector<64x128xf32>
    %36 = arith.addf %33, %35 : vector<64x128xf32>
    %37 = vector.extract_strided_slice %36 {offsets = [0, 0], sizes = [64, 3], strides = [1, 1]} : vector<64x128xf32> to vector<64x3xf32>
    %cst_38 = arith.constant 1.000000e+00 : f32
    %38 = vector.broadcast %cst_38 : f32 to vector<64x3xf32>
    %39 = arith.divf %37, %38 : vector<64x3xf32>
    %40 = vector.extract_strided_slice %36 {offsets = [0, 3], sizes = [64, 3], strides = [1, 1]} : vector<64x128xf32> to vector<64x3xf32>
    %cst_39 = arith.constant 1.000000e+00 : f32
    %41 = vector.broadcast %cst_39 : f32 to vector<64x3xf32>
    %42 = arith.divf %40, %41 : vector<64x3xf32>
    %43 = vector.extract_strided_slice %36 {offsets = [0, 6], sizes = [64, 3], strides = [1, 1]} : vector<64x128xf32> to vector<64x3xf32>
    %cst_40 = arith.constant 1.000000e+00 : f32
    %44 = vector.broadcast %cst_40 : f32 to vector<64x3xf32>
    %45 = arith.divf %43, %44 : vector<64x3xf32>
    %cst_41 = arith.constant 4.13516665 : f32
    %46 = vector.broadcast %cst_41 : f32 to vector<64x3xf32>
    %47 = arith.minimumf %45, %46 : vector<64x3xf32>
    %48 = vector.extract_strided_slice %36 {offsets = [0, 9], sizes = [64, 3], strides = [1, 1]} : vector<64x128xf32> to vector<64x3xf32>
    %cst_42 = arith.constant 1.000000e+00 : f32
    %49 = vector.broadcast %cst_42 : f32 to vector<64x3xf32>
    %50 = arith.divf %48, %49 : vector<64x3xf32>
    %cst_43 = arith.constant 4.13516665 : f32
    %51 = vector.broadcast %cst_43 : f32 to vector<64x3xf32>
    %52 = arith.minimumf %50, %51 : vector<64x3xf32>
    %53 = vector.extract_strided_slice %36 {offsets = [0, 12], sizes = [64, 3], strides = [1, 1]} : vector<64x128xf32> to vector<64x3xf32>
    %c0_44 = arith.constant 0 : index
    %c0_45 = arith.constant 0 : index
    %54 = vector.load %arg6[%c0_44, %c0_45] : memref<64x12xf32, #tpu.memory_space<vmem>>, vector<64x3xf32>
    %c0_46 = arith.constant 0 : index
    %c3 = arith.constant 3 : index
    %55 = vector.load %arg6[%c0_46, %c3] : memref<64x12xf32, #tpu.memory_space<vmem>>, vector<64x3xf32>
    %c0_47 = arith.constant 0 : index
    %c6 = arith.constant 6 : index
    %56 = vector.load %arg6[%c0_47, %c6] : memref<64x12xf32, #tpu.memory_space<vmem>>, vector<64x3xf32>
    %c0_48 = arith.constant 0 : index
    %c9 = arith.constant 9 : index
    %57 = vector.load %arg6[%c0_48, %c9] : memref<64x12xf32, #tpu.memory_space<vmem>>, vector<64x3xf32>
    %58 = arith.mulf %39, %56 : vector<64x3xf32>
    %59 = arith.addf %58, %54 : vector<64x3xf32>
    %60 = arith.mulf %42, %57 : vector<64x3xf32>
    %61 = arith.addf %60, %55 : vector<64x3xf32>
    %62 = math.exp %47 : vector<64x3xf32>
    %63 = arith.mulf %62, %56 : vector<64x3xf32>
    %64 = math.exp %52 : vector<64x3xf32>
    %65 = arith.mulf %64, %57 : vector<64x3xf32>
    %cst_49 = arith.constant 5.000000e-01 : f32
    %66 = vector.broadcast %cst_49 : f32 to vector<64x3xf32>
    %67 = arith.mulf %66, %63 : vector<64x3xf32>
    %68 = arith.subf %59, %67 : vector<64x3xf32>
    %cst_50 = arith.constant 0.000000e+00 : f32
    %cst_51 = arith.constant 6.400000e+01 : f32
    %69 = vector.broadcast %cst_50 : f32 to vector<64x3xf32>
    %70 = arith.maximumf %69, %68 : vector<64x3xf32>
    %71 = vector.broadcast %cst_51 : f32 to vector<64x3xf32>
    %72 = arith.minimumf %71, %70 : vector<64x3xf32>
    %cst_52 = arith.constant 5.000000e-01 : f32
    %73 = vector.broadcast %cst_52 : f32 to vector<64x3xf32>
    %74 = arith.mulf %73, %65 : vector<64x3xf32>
    %75 = arith.subf %61, %74 : vector<64x3xf32>
    %cst_53 = arith.constant 0.000000e+00 : f32
    %cst_54 = arith.constant 6.400000e+01 : f32
    %76 = vector.broadcast %cst_53 : f32 to vector<64x3xf32>
    %77 = arith.maximumf %76, %75 : vector<64x3xf32>
    %78 = vector.broadcast %cst_54 : f32 to vector<64x3xf32>
    %79 = arith.minimumf %78, %77 : vector<64x3xf32>
    %cst_55 = arith.constant 5.000000e-01 : f32
    %80 = vector.broadcast %cst_55 : f32 to vector<64x3xf32>
    %81 = arith.mulf %80, %63 : vector<64x3xf32>
    %82 = arith.addf %59, %81 : vector<64x3xf32>
    %cst_56 = arith.constant 0.000000e+00 : f32
    %cst_57 = arith.constant 6.400000e+01 : f32
    %83 = vector.broadcast %cst_56 : f32 to vector<64x3xf32>
    %84 = arith.maximumf %83, %82 : vector<64x3xf32>
    %85 = vector.broadcast %cst_57 : f32 to vector<64x3xf32>
    %86 = arith.minimumf %85, %84 : vector<64x3xf32>
    %cst_58 = arith.constant 5.000000e-01 : f32
    %87 = vector.broadcast %cst_58 : f32 to vector<64x3xf32>
    %88 = arith.mulf %87, %65 : vector<64x3xf32>
    %89 = arith.addf %61, %88 : vector<64x3xf32>
    %cst_59 = arith.constant 0.000000e+00 : f32
    %cst_60 = arith.constant 6.400000e+01 : f32
    %90 = vector.broadcast %cst_59 : f32 to vector<64x3xf32>
    %91 = arith.maximumf %90, %89 : vector<64x3xf32>
    %92 = vector.broadcast %cst_60 : f32 to vector<64x3xf32>
    %93 = arith.minimumf %92, %91 : vector<64x3xf32>
    %94 = arith.subf %86, %72 : vector<64x3xf32>
    %cst_61 = arith.constant 1.000000e+00 : f32
    %95 = vector.broadcast %cst_61 : f32 to vector<64x3xf32>
    %96 = arith.cmpf oge, %94, %95 : vector<64x3xf32>
    %97 = arith.subf %93, %79 : vector<64x3xf32>
    %cst_62 = arith.constant 1.000000e+00 : f32
    %98 = vector.broadcast %cst_62 : f32 to vector<64x3xf32>
    %99 = arith.cmpf oge, %97, %98 : vector<64x3xf32>
    %100 = arith.andi %96, %99 : vector<64x3xi1>
    %101 = arith.negf %53 : vector<64x3xf32>
    %102 = math.exp %101 : vector<64x3xf32>
    %cst_63 = arith.constant 1.000000e+00 : f32
    %103 = vector.broadcast %cst_63 : f32 to vector<64x3xf32>
    %104 = arith.addf %103, %102 : vector<64x3xf32>
    %105 = arith.divf %103, %104 : vector<64x3xf32>
    %cst_64 = arith.constant -1.000000e+00 : f32
    %106 = vector.broadcast %cst_64 : f32 to vector<64x3xf32>
    %107 = arith.select %100, %105, %106 : vector<64x3xi1>, vector<64x3xf32>
    %cst_65 = arith.constant 0.000000e+00 : f32
    %108 = vector.broadcast %cst_65 : f32 to vector<64x113xf32>
    %109 = tpu.concatenate %72, %79, %86, %93, %107, %108 in 1 : vector<64x3xf32>, vector<64x3xf32>, vector<64x3xf32>, vector<64x3xf32>, vector<64x3xf32>, vector<64x113xf32> -> vector<64x128xf32>
    %c0_66 = arith.constant 0 : index
    %c0_67 = arith.constant 0 : index
    %c0_68 = arith.constant 0 : index
    %110 = vector.load %arg7[%c0_66, %c0_67, %c0_68] : memref<1x64x128xf32, #tpu.memory_space<vmem>>, vector<1x64x128xf32>
    %111 = vector.shape_cast %110 : vector<1x64x128xf32> to vector<64x128xf32>
    %112 = vector.shape_cast %109 : vector<64x128xf32> to vector<1x64x128xf32>
    tpu.vector_store %arg7[%c0_66, %c0_67, %c0_68], %112 {strides = array<i32>} : memref<1x64x128xf32, #tpu.memory_space<vmem>>, vector<1x64x128xf32>,
    return
  }
  func.func @transform_0(%arg0: i32) -> (i32, i32, i32, i32) {
    %c0_i32 = arith.constant 0 : i32
    %c0_i32_0 = arith.constant 0 : i32
    %c0_i32_1 = arith.constant 0 : i32
    %c0_i32_2 = arith.constant 0 : i32
    return %arg0, %c0_i32, %c0_i32_0, %c0_i32_1 : i32, i32, i32, i32
  }
  func.func @transform_1(%arg0: i32) -> (i32, i32) {
    %c0_i32 = arith.constant 0 : i32
    %c0_i32_0 = arith.constant 0 : i32
    %c0_i32_1 = arith.constant 0 : i32
    return %c0_i32, %c0_i32_0 : i32, i32
  }
  func.func @transform_2(%arg0: i32) -> (i32, i32) {
    %c0_i32 = arith.constant 0 : i32
    %c0_i32_0 = arith.constant 0 : i32
    %c0_i32_1 = arith.constant 0 : i32
    return %c0_i32, %c0_i32_0 : i32, i32
  }
  func.func @transform_3(%arg0: i32) -> (i32, i32) {
    %c0_i32 = arith.constant 0 : i32
    %c0_i32_0 = arith.constant 0 : i32
    %c0_i32_1 = arith.constant 0 : i32
    return %c0_i32, %c0_i32_0 : i32, i32
  }
  func.func @transform_4(%arg0: i32) -> (i32, i32) {
    %c0_i32 = arith.constant 0 : i32
    %c0_i32_0 = arith.constant 0 : i32
    %c0_i32_1 = arith.constant 0 : i32
    return %c0_i32, %c0_i32_0 : i32, i32
  }
  func.func @transform_5(%arg0: i32) -> (i32, i32) {
    %c0_i32 = arith.constant 0 : i32
    %c0_i32_0 = arith.constant 0 : i32
    %c0_i32_1 = arith.constant 0 : i32
    return %c0_i32, %c0_i32_0 : i32, i32
  }
  func.func @transform_6(%arg0: i32) -> (i32, i32, i32) {
    %c0_i32 = arith.constant 0 : i32
    %c0_i32_0 = arith.constant 0 : i32
    %c0_i32_1 = arith.constant 0 : i32
    return %arg0, %c0_i32, %c0_i32_0 : i32, i32, i32
  }
}

</mosaic_0001>

<llo_original>
// kernel: tpu_custom_call.1
$region0: #{tpu_custom_call.1}
  #allocation0 [shape = 'u32[]', space=smem, size = 0x4, offset = 0x4, fixed_abs, tag = 'smem constant byte address 0x4 - core index']
  #allocation1 [shape = 'u32[72,128]{1,0:T(1,128)}', space=vmem, size = 0x9000, scoped, tag = 'internal scratch']
  #allocation2 [shape = 'bf16[8,8,288]{2,1,0:T(8,128)(2,1)}', space=vmem, size = 0xc000, scoped, tag = 'scratch operand']
  %s0 = inlined_call_operand.vmem [shape: f32[2,8,8,32], index: 0, kind: input, shape index: {}]
  %s1 = inlined_call_operand.vmem [shape: bf16[288,32], index: 1, kind: input, shape index: {}]
  %s2 = inlined_call_operand.vmem [shape: f32[1,32], index: 2, kind: input, shape index: {}]
  %s3 = inlined_call_operand.vmem [shape: bf16[32,128], index: 3, kind: input, shape index: {}]
  %s4 = inlined_call_operand.vmem [shape: f32[1,128], index: 4, kind: input, shape index: {}]
  %s5 = inlined_call_operand.vmem [shape: f32[64,12], index: 5, kind: input, shape index: {}]
  %s6 = inlined_call_operand.hbm [shape: f32[2,64,128], index: 6, kind: output, shape index: {}]
  %s7 = sld [smem:[#allocation0]]
  $region57: #{tpu_custom_call.1} parent=0
    _
  %s9 = ssub.s32 1, %s7
  %s10 = scalar_select 0, %s9, %s7
  $region1: #{tpu_custom_call.1} parent=0
    #allocation3 [shape = 'u8[65536]{0}', space=vmem, size = 0x10000, scoped, tag = 'output window, operand 0']
    #allocation4 [shape = 's32[2]{0}', space=sflag, size = 0x8, scoped, tag = 'scoped memory for tpu_custom_call.1']
    %11 = vsyncpa [#allocation4], 0
    %s12 = scalar_lea.sflag [#allocation4], 1
    %13 = vsyncpa %s12, 0
    loop: start=0, step=1, limit=4
    $region2: #{tpu_custom_call.1} parent=1 // loop_pre_header
      _
    $region3: #{tpu_custom_call.1} parent=1 // loop_header
      %s15 = sphi 0, %s19
      %p16 = scmp.ge.s32.totalorder %s15, 4
      %s25 = sphi 0, %s27
      %s28 = sphi 0, %s25
      %s29 = sphi 0, %s28
      %s45 = sphi 0, %s29
      %s49 = sphi 0, %s49
      %s51 = sphi 0, %s49
      %s52 = sphi 0, %s51
      %s66 = sphi 0, %s52
      %s70 = sphi 0, %s70
      %s72 = sphi 0, %s70
      %s73 = sphi 0, %s72
      %s87 = sphi 0, %s73
      %s91 = sphi 0, %s91
      %s93 = sphi 0, %s91
      %s94 = sphi 0, %s93
      %s108 = sphi 0, %s94
      %s112 = sphi 0, %s112
      %s114 = sphi 0, %s112
      %s115 = sphi 0, %s114
      %s129 = sphi 0, %s115
      %s133 = sphi 0, %s133
      %s135 = sphi 0, %s133
      %s136 = sphi 0, %s135
      %s150 = sphi 0, %s136
      %s156 = sphi 0, %s158
      %s159 = sphi 0, %s156
      %s160 = sphi 0, %s159
      %s176 = sphi 0, %s160
    $region4: #{tpu_custom_call.1} parent=1 // loop_header_branch
      %18 = sbr.rel (%p16) target = $region8
    $region5: #{tpu_custom_call.1} parent=1 // loop_body
      %s20 = ssub.s32 %s15, 1
      %s21 = ssub.s32 %s15, 2
      %s22 = sadd.s32 %s15, 1
      %s23 = ssub.s32 %s15, %s22
      %p24 = scmp.eq.s32.totalorder %s23, 0
      %s26 = sadd.s32 %s25, 1
      %s27 = scalar_select %p24, %s25, %s26
      %p30 = pneg %p24
      %p31 = scmp.eq.s32.totalorder %s15, 1
      %p32 = por %p30, %p31
      %p33 = scmp.ne.s32.totalorder %s25, %s28
      %p34 = scmp.eq.s32.totalorder %s15, 0
      %p35 = por %p33, %p34
      %p36 = scmp.ne.s32.totalorder %s25, %s28
      %p37 = scmp.eq.s32.totalorder %s20, 1
      %p38 = por %p36, %p37
      %p39 = scmp.ne.s32.totalorder %s28, %s29
      %p40 = scmp.eq.s32.totalorder %s20, 0
      %p41 = por %p39, %p40
      %p42 = scmp.ne.s32.totalorder %s28, %s29
      %p43 = scmp.eq.s32.totalorder %s21, 1
      %p44 = por %p42, %p43
      %p46 = scmp.ne.s32.totalorder %s29, %s45
      %p47 = scmp.eq.s32.totalorder %s21, 0
      %p48 = por %p46, %p47
      %s50 = sadd.s32 %s49, 1
      %p53 = scmp.eq.s32.totalorder %s15, 1
      %p54 = scmp.ne.s32.totalorder %s49, %s51
      %p55 = scmp.eq.s32.totalorder %s15, 0
      %p56 = por %p54, %p55
      %p57 = scmp.ne.s32.totalorder %s49, %s51
      %p58 = scmp.eq.s32.totalorder %s20, 1
      %p59 = por %p57, %p58
      %p60 = scmp.ne.s32.totalorder %s51, %s52
      %p61 = scmp.eq.s32.totalorder %s20, 0
      %p62 = por %p60, %p61
      %p63 = scmp.ne.s32.totalorder %s51, %s52
      %p64 = scmp.eq.s32.totalorder %s21, 1
      %p65 = por %p63, %p64
      %p67 = scmp.ne.s32.totalorder %s52, %s66
      %p68 = scmp.eq.s32.totalorder %s21, 0
      %p69 = por %p67, %p68
      %s71 = sadd.s32 %s70, 1
      %p74 = scmp.eq.s32.totalorder %s15, 1
      %p75 = scmp.ne.s32.totalorder %s70, %s72
      %p76 = scmp.eq.s32.totalorder %s15, 0
      %p77 = por %p75, %p76
      %p78 = scmp.ne.s32.totalorder %s70, %s72
      %p79 = scmp.eq.s32.totalorder %s20, 1
      %p80 = por %p78, %p79
      %p81 = scmp.ne.s32.totalorder %s72, %s73
      %p82 = scmp.eq.s32.totalorder %s20, 0
      %p83 = por %p81, %p82
      %p84 = scmp.ne.s32.totalorder %s72, %s73
      %p85 = scmp.eq.s32.totalorder %s21, 1
      %p86 = por %p84, %p85
      %p88 = scmp.ne.s32.totalorder %s73, %s87
      %p89 = scmp.eq.s32.totalorder %s21, 0
      %p90 = por %p88, %p89
      %s92 = sadd.s32 %s91, 1
      %p95 = scmp.eq.s32.totalorder %s15, 1
      %p96 = scmp.ne.s32.totalorder %s91, %s93
      %p97 = scmp.eq.s32.totalorder %s15, 0
      %p98 = por %p96, %p97
      %p99 = scmp.ne.s32.totalorder %s91, %s93
      %p100 = scmp.eq.s32.totalorder %s20, 1
      %p101 = por %p99, %p100
      %p102 = scmp.ne.s32.totalorder %s93, %s94
      %p103 = scmp.eq.s32.totalorder %s20, 0
      %p104 = por %p102, %p103
      %p105 = scmp.ne.s32.totalorder %s93, %s94
      %p106 = scmp.eq.s32.totalorder %s21, 1
      %p107 = por %p105, %p106
      %p109 = scmp.ne.s32.totalorder %s94, %s108
      %p110 = scmp.eq.s32.totalorder %s21, 0
      %p111 = por %p109, %p110
      %s113 = sadd.s32 %s112, 1
      %p116 = scmp.eq.s32.totalorder %s15, 1
      %p117 = scmp.ne.s32.totalorder %s112, %s114
      %p118 = scmp.eq.s32.totalorder %s15, 0
      %p119 = por %p117, %p118
      %p120 = scmp.ne.s32.totalorder %s112, %s114
      %p121 = scmp.eq.s32.totalorder %s20, 1
      %p122 = por %p120, %p121
      %p123 = scmp.ne.s32.totalorder %s114, %s115
      %p124 = scmp.eq.s32.totalorder %s20, 0
      %p125 = por %p123, %p124
      %p126 = scmp.ne.s32.totalorder %s114, %s115
      %p127 = scmp.eq.s32.totalorder %s21, 1
      %p128 = por %p126, %p127
      %p130 = scmp.ne.s32.totalorder %s115, %s129
      %p131 = scmp.eq.s32.totalorder %s21, 0
      %p132 = por %p130, %p131
      %s134 = sadd.s32 %s133, 1
      %p137 = scmp.eq.s32.totalorder %s15, 1
      %p138 = scmp.ne.s32.totalorder %s133, %s135
      %p139 = scmp.eq.s32.totalorder %s15, 0
      %p140 = por %p138, %p139
      %p141 = scmp.ne.s32.totalorder %s133, %s135
      %p142 = scmp.eq.s32.totalorder %s20, 1
      %p143 = por %p141, %p142
      %p144 = scmp.ne.s32.totalorder %s135, %s136
      %p145 = scmp.eq.s32.totalorder %s20, 0
      %p146 = por %p144, %p145
      %p147 = scmp.ne.s32.totalorder %s135, %s136
      %p148 = scmp.eq.s32.totalorder %s21, 1
      %p149 = por %p147, %p148
      %p151 = scmp.ne.s32.totalorder %s136, %s150
      %p152 = scmp.eq.s32.totalorder %s21, 0
      %p153 = por %p151, %p152
      %s154 = ssub.s32 %s15, %s22
      %p155 = scmp.eq.s32.totalorder %s154, 0
      %s157 = sadd.s32 %s156, 1
      %s158 = scalar_select %p155, %s156, %s157
      %p161 = pneg %p155
      %p162 = scmp.eq.s32.totalorder %s15, 1
      %p163 = por %p161, %p162
      %p164 = scmp.ne.s32.totalorder %s156, %s159
      %p165 = scmp.eq.s32.totalorder %s15, 0
      %p166 = por %p164, %p165
      %p167 = scmp.ne.s32.totalorder %s156, %s159
      %p168 = scmp.eq.s32.totalorder %s20, 1
      %p169 = por %p167, %p168
      %p170 = scmp.ne.s32.totalorder %s159, %s160
      %p171 = scmp.eq.s32.totalorder %s20, 0
      %p172 = por %p170, %p171
      %p173 = scmp.ne.s32.totalorder %s159, %s160
      %p174 = scmp.eq.s32.totalorder %s21, 1
      %p175 = por %p173, %p174
      %p177 = scmp.ne.s32.totalorder %s160, %s176
      %p178 = scmp.eq.s32.totalorder %s21, 0
      %p179 = por %p177, %p178
      %p180 = scmp.le.s32.totalorder 1, %s15
      %p181 = scmp.lt.s32.totalorder %s15, 3
      %p182 = pnand %p180, %p181
      %p183 = pneg %p182
      // Predicated region
      $region9: #{tpu_custom_call.1} parent=5 // pred_check
        _
      $region10: #{tpu_custom_call.1} parent=5 // pred_check_branch
        %185 = sbr.rel (%p182) target = $region12
      $region11: #{tpu_custom_call.1} parent=5 // pred_region
        %s186 = ssub.s32 %s15, 1
        // Predicated region
        $region13: #{tpu_custom_call.1} parent=11 // pred_check
          %p187 = pneg %p62
        $region14: #{tpu_custom_call.1} parent=11 // pred_check_branch
          %189 = sbr.rel (%p187) target = $region16
        $region15: #{tpu_custom_call.1} parent=11 // pred_region
          _
        $region16: #{tpu_custom_call.1} parent=11 // pred_fallthru
          _
        // Predicated region
        $region17: #{tpu_custom_call.1} parent=11 // pred_check
          %p190 = pneg %p83
        $region18: #{tpu_custom_call.1} parent=11 // pred_check_branch
          %192 = sbr.rel (%p190) target = $region20
        $region19: #{tpu_custom_call.1} parent=11 // pred_region
          _
        $region20: #{tpu_custom_call.1} parent=11 // pred_fallthru
          _
        // Predicated region
        $region21: #{tpu_custom_call.1} parent=11 // pred_check
          %p193 = pneg %p104
        $region22: #{tpu_custom_call.1} parent=11 // pred_check_branch
          %195 = sbr.rel (%p193) target = $region24
        $region23: #{tpu_custom_call.1} parent=11 // pred_region
          _
        $region24: #{tpu_custom_call.1} parent=11 // pred_fallthru
          _
        // Predicated region
        $region25: #{tpu_custom_call.1} parent=11 // pred_check
          %p196 = pneg %p125
        $region26: #{tpu_custom_call.1} parent=11 // pred_check_branch
          %198 = sbr.rel (%p196) target = $region28
        $region27: #{tpu_custom_call.1} parent=11 // pred_region
          _
        $region28: #{tpu_custom_call.1} parent=11 // pred_fallthru
          _
        // Predicated region
        $region29: #{tpu_custom_call.1} parent=11 // pred_check
          %p199 = pneg %p146
        $region30: #{tpu_custom_call.1} parent=11 // pred_check_branch
          %201 = sbr.rel (%p199) target = $region32
        $region31: #{tpu_custom_call.1} parent=11 // pred_region
          _
        $region32: #{tpu_custom_call.1} parent=11 // pred_fallthru
          _
      $region12: #{tpu_custom_call.1} parent=5 // pred_fallthru
        _
      %p202 = scmp.lt.s32.totalorder %s15, 2
      // Predicated region
      $region33: #{tpu_custom_call.1} parent=5 // pred_check
        %p203 = pneg %p202
      $region34: #{tpu_custom_call.1} parent=5 // pred_check_branch
        %205 = sbr.rel (%p203) target = $region36
      $region35: #{tpu_custom_call.1} parent=5 // pred_region
        // Predicated region
        $region37: #{tpu_custom_call.1} parent=35 // pred_check
          %p206 = pneg %p35
        $region38: #{tpu_custom_call.1} parent=35 // pred_check_branch
          %208 = sbr.rel (%p206) target = $region40
        $region39: #{tpu_custom_call.1} parent=35 // pred_region
          %p209 = scmp.lt.s32.totalorder %s15, 1
          %s210 = scalar_select %p209, %s15, 1
          %s211 = smul.addr %s210, 8
          %s212 = smul.addr %s211, 8
          %s213 = scalar_lea.vmem %s0, %s212
        $region40: #{tpu_custom_call.1} parent=35 // pred_fallthru
          _
      $region36: #{tpu_custom_call.1} parent=5 // pred_fallthru
        _
      %p214 = scmp.le.s32.totalorder 1, %s15
      %p215 = scmp.lt.s32.totalorder %s15, 3
      %p216 = pnand %p214, %p215
      %p217 = pneg %p216
      // Predicated region
      $region41: #{tpu_custom_call.1} parent=5 // pred_check
        _
      $region42: #{tpu_custom_call.1} parent=5 // pred_check_branch
        %219 = sbr.rel (%p216) target = $region44
      $region43: #{tpu_custom_call.1} parent=5 // pred_region
        %s220 = ssub.s32 %s15, 1
        %p221 = scmp.lt.s32.totalorder %s20, 1
        %s222 = scalar_select %p221, %s20, 1
        %s223 = smul.addr %s222, 8
        %s224 = smul.addr %s223, 8
        %s225 = scalar_lea.vmem %s0, %s224
        %p226 = pneg %p41
        %p227 = pneg %p38
        %p228 = pneg %p62
        %p229 = pneg %p59
        %p230 = pneg %p83
        %p231 = pneg %p80
        %p232 = pneg %p104
        %p233 = pneg %p101
        %p234 = pneg %p125
        %p235 = pneg %p122
        %p236 = pneg %p146
        %p237 = pneg %p143
        %p238 = pneg %p172
        %p239 = pneg %p169
        %s240 = sand.u32 %s159, 1
        %s241 = scalar_lea.sflag [#allocation4], %s240
        %s242 = sand.u32 %s159, 1
        %s243 = smul.addr %s242, 64
        %s244 = scalar_lea.vmem [#allocation3], %s243
        %p245 = scmp.lt.s32.totalorder %s20, 1
        %s246 = scalar_select %p245, %s20, 1
        %s247 = smul.addr %s246, 8
        %s248 = smul.addr %s247, 8
        %s249 = scalar_lea.vmem %s0, %s248
        %v251 = vld [vmem:[%s249] sm:$0xff]
        %v252 = vld [vmem:[%s249 + $0x8] sm:$0xff]
        %v253 = vld [vmem:[%s249 + $0x10] sm:$0xff]
        %v254 = vld [vmem:[%s249 + $0x18] sm:$0xff]
        %v255 = vld [vmem:[%s249 + $0x20] sm:$0xff]
        %v256 = vld [vmem:[%s249 + $0x28] sm:$0xff]
        %v257 = vld [vmem:[%s249 + $0x30] sm:$0xff]
        %v258 = vld [vmem:[%s249 + $0x38] sm:$0xff]
        %v259 = vpack.c.bf16 %v251, %v251
        %v260 = vpack.c.bf16 %v252, %v252
        %v261 = vpack.c.bf16 %v253, %v253
        %v262 = vpack.c.bf16 %v254, %v254
        %v263 = vpack.c.bf16 %v255, %v255
        %v264 = vpack.c.bf16 %v256, %v256
        %v265 = vpack.c.bf16 %v257, %v257
        %v266 = vpack.c.bf16 %v258, %v258
        %267 = vst [vmem:[#allocation2] sm:$0xff] 0
        %vm268 = vcmask 257024
        %269 = vst.msk [vmem:[#allocation2 + $0x8] sm:$0xf] %vm268, 0
        %270 = vst [vmem:[#allocation2 + $0xc] sm:$0xff] 0
        %271 = vst.msk [vmem:[#allocation2 + $0x14] sm:$0xf] %vm268, 0
        %272 = vst [vmem:[#allocation2 + $0x18] sm:$0xff] 0
        %273 = vst.msk [vmem:[#allocation2 + $0x20] sm:$0xf] %vm268, 0
        %274 = vst [vmem:[#allocation2 + $0x24] sm:$0xff] 0
        %275 = vst.msk [vmem:[#allocation2 + $0x2c] sm:$0xf] %vm268, 0
        %276 = vst [vmem:[#allocation2 + $0x30] sm:$0xff] 0
        %277 = vst.msk [vmem:[#allocation2 + $0x38] sm:$0xf] %vm268, 0
        %278 = vst [vmem:[#allocation2 + $0x3c] sm:$0xff] 0
        %279 = vst.msk [vmem:[#allocation2 + $0x44] sm:$0xf] %vm268, 0
        %280 = vst [vmem:[#allocation2 + $0x48] sm:$0xff] 0
        %281 = vst.msk [vmem:[#allocation2 + $0x50] sm:$0xf] %vm268, 0
        %282 = vst [vmem:[#allocation2 + $0x54] sm:$0xff] 0
        %283 = vst.msk [vmem:[#allocation2 + $0x5c] sm:$0xf] %vm268, 0
        %v285 = vshrl.u32 %v259, 16
        %v287 = vrot.slane %v285, 7
        %v288 = vshll.u32 %v259, 16
        %v290 = vor.u32 %v287, %v288
        %v292 = vshrl.u32 %v260, 16
        %v294 = vrot.slane %v292, 7
        %v295 = vshll.u32 %v260, 16
        %v297 = vor.u32 %v294, %v295
        %v299 = vshrl.u32 %v261, 16
        %v301 = vrot.slane %v299, 7
        %v302 = vshll.u32 %v261, 16
        %v304 = vor.u32 %v301, %v302
        %v306 = vshrl.u32 %v262, 16
        %v308 = vrot.slane %v306, 7
        %v309 = vshll.u32 %v262, 16
        %v311 = vor.u32 %v308, %v309
        %v313 = vshrl.u32 %v263, 16
        %v315 = vrot.slane %v313, 7
        %v316 = vshll.u32 %v263, 16
        %v318 = vor.u32 %v315, %v316
        %v320 = vshrl.u32 %v264, 16
        %v322 = vrot.slane %v320, 7
        %v323 = vshll.u32 %v264, 16
        %v325 = vor.u32 %v322, %v323
        %v327 = vshrl.u32 %v265, 16
        %v329 = vrot.slane %v327, 7
        %v330 = vshll.u32 %v265, 16
        %v332 = vor.u32 %v329, %v330
        %s340 = scalar_lea.vmem [#allocation2], 12
        %vm341 = vcmask 257024
        %vm342 = vsmask.f32 7938
        %vm343 = vmand %vm341, %vm342
        %v344 = vld [vmem:[%s340] sm:$0xf]
        %v345 = vsel %vm343, %v290, %v344
        %346 = vst [vmem:[%s340] sm:$0xf] %v345
        %v347 = vld [vmem:[%s340 + $0xc] sm:$0xf]
        %v348 = vsel %vm343, %v297, %v347
        %349 = vst [vmem:[%s340 + $0xc] sm:$0xf] %v348
        %v350 = vld [vmem:[%s340 + $0x18] sm:$0xf]
        %v351 = vsel %vm343, %v304, %v350
        %352 = vst [vmem:[%s340 + $0x18] sm:$0xf] %v351
        %v353 = vld [vmem:[%s340 + $0x24] sm:$0xf]
        %v354 = vsel %vm343, %v311, %v353
        %355 = vst [vmem:[%s340 + $0x24] sm:$0xf] %v354
        %v356 = vld [vmem:[%s340 + $0x30] sm:$0xf]
        %v357 = vsel %vm343, %v318, %v356
        %358 = vst [vmem:[%s340 + $0x30] sm:$0xf] %v357
        %v359 = vld [vmem:[%s340 + $0x3c] sm:$0xf]
        %v360 = vsel %vm343, %v325, %v359
        %361 = vst [vmem:[%s340 + $0x3c] sm:$0xf] %v360
        %v362 = vld [vmem:[%s340 + $0x48] sm:$0xf]
        %v363 = vsel %vm343, %v332, %v362
        %364 = vst [vmem:[%s340 + $0x48] sm:$0xf] %v363
        %372 = vrot.lane.b32.xlu0 %v259, 32
        %v373 = vpop.permute.xlu0 %372
        %374 = vrot.lane.b32.xlu0 %v260, 32
        %v375 = vpop.permute.xlu0 %374
        %376 = vrot.lane.b32.xlu0 %v261, 32
        %v377 = vpop.permute.xlu0 %376
        %378 = vrot.lane.b32.xlu0 %v262, 32
        %v379 = vpop.permute.xlu0 %378
        %380 = vrot.lane.b32.xlu0 %v263, 32
        %v381 = vpop.permute.xlu0 %380
        %382 = vrot.lane.b32.xlu0 %v264, 32
        %v383 = vpop.permute.xlu0 %382
        %384 = vrot.lane.b32.xlu0 %v265, 32
        %v385 = vpop.permute.xlu0 %384
        %vm393 = vcmask 519424
        %394 = vst.msk [vmem:[%s340] sm:$0xf] %vm393, %v373
        %395 = vst.msk [vmem:[%s340 + $0xc] sm:$0xf] %vm393, %v375
        %396 = vst.msk [vmem:[%s340 + $0x18] sm:$0xf] %vm393, %v377
        %397 = vst.msk [vmem:[%s340 + $0x24] sm:$0xf] %vm393, %v379
        %398 = vst.msk [vmem:[%s340 + $0x30] sm:$0xf] %vm393, %v381
        %399 = vst.msk [vmem:[%s340 + $0x3c] sm:$0xf] %vm393, %v383
        %400 = vst.msk [vmem:[%s340 + $0x48] sm:$0xf] %vm393, %v385
        %v401 = vrot.slane %v285, 4
        %v402 = vrot.slane %v288, 5
        %v403 = vor.u32 %v401, %v402
        %v404 = vrot.slane %v403, 4
        %v405 = vrot.slane %v292, 4
        %v406 = vrot.slane %v295, 5
        %v407 = vor.u32 %v405, %v406
        %v408 = vrot.slane %v407, 4
        %v409 = vrot.slane %v299, 4
        %v410 = vrot.slane %v302, 5
        %v411 = vor.u32 %v409, %v410
        %v412 = vrot.slane %v411, 4
        %v413 = vrot.slane %v306, 4
        %v414 = vrot.slane %v309, 5
        %v415 = vor.u32 %v413, %v414
        %v416 = vrot.slane %v415, 4
        %v417 = vrot.slane %v313, 4
        %v418 = vrot.slane %v316, 5
        %v419 = vor.u32 %v417, %v418
        %v420 = vrot.slane %v419, 4
        %v421 = vrot.slane %v320, 4
        %v422 = vrot.slane %v323, 5
        %v423 = vor.u32 %v421, %v422
        %v424 = vrot.slane %v423, 4
        %v425 = vrot.slane %v327, 4
        %v426 = vrot.slane %v330, 5
        %v427 = vor.u32 %v425, %v426
        %v428 = vrot.slane %v427, 4
        %429 = vrot.lane.b32.xlu0 %v404, 64
        %v430 = vpop.permute.xlu0 %429
        %431 = vrot.lane.b32.xlu0 %v408, 64
        %v432 = vpop.permute.xlu0 %431
        %433 = vrot.lane.b32.xlu0 %v412, 64
        %v434 = vpop.permute.xlu0 %433
        %435 = vrot.lane.b32.xlu0 %v416, 64
        %v436 = vpop.permute.xlu0 %435
        %437 = vrot.lane.b32.xlu0 %v420, 64
        %v438 = vpop.permute.xlu0 %437
        %439 = vrot.lane.b32.xlu0 %v424, 64
        %v440 = vpop.permute.xlu0 %439
        %441 = vrot.lane.b32.xlu0 %v428, 64
        %v442 = vpop.permute.xlu0 %441
        %vm450 = vcmask 781824
        %vm451 = vsmask.f32 3328
        %vm452 = vmand %vm450, %vm451
        %v453 = vld [vmem:[%s340] sm:$0xf]
        %v454 = vsel %vm452, %v430, %v453
        %455 = vst [vmem:[%s340] sm:$0xf] %v454
        %v456 = vld [vmem:[%s340 + $0xc] sm:$0xf]
        %v457 = vsel %vm452, %v432, %v456
        %458 = vst [vmem:[%s340 + $0xc] sm:$0xf] %v457
        %v459 = vld [vmem:[%s340 + $0x18] sm:$0xf]
        %v460 = vsel %vm452, %v434, %v459
        %461 = vst [vmem:[%s340 + $0x18] sm:$0xf] %v460
        %v462 = vld [vmem:[%s340 + $0x24] sm:$0xf]
        %v463 = vsel %vm452, %v436, %v462
        %464 = vst [vmem:[%s340 + $0x24] sm:$0xf] %v463
        %v465 = vld [vmem:[%s340 + $0x30] sm:$0xf]
        %v466 = vsel %vm452, %v438, %v465
        %467 = vst [vmem:[%s340 + $0x30] sm:$0xf] %v466
        %v468 = vld [vmem:[%s340 + $0x3c] sm:$0xf]
        %v469 = vsel %vm452, %v440, %v468
        %470 = vst [vmem:[%s340 + $0x3c] sm:$0xf] %v469
        %v471 = vld [vmem:[%s340 + $0x48] sm:$0xf]
        %v472 = vsel %vm452, %v442, %v471
        %473 = vst [vmem:[%s340 + $0x48] sm:$0xf] %v472
        %v475 = vshrl.u32 %v266, 16
        %v477 = vrot.slane %v475, 7
        %v478 = vshll.u32 %v266, 16
        %v480 = vor.u32 %v477, %v478
        %481 = vrot.lane.b32.xlu0 %v290, 96
        %v482 = vpop.permute.xlu0 %481
        %483 = vrot.lane.b32.xlu0 %v297, 96
        %v484 = vpop.permute.xlu0 %483
        %485 = vrot.lane.b32.xlu0 %v304, 96
        %v486 = vpop.permute.xlu0 %485
        %487 = vrot.lane.b32.xlu0 %v311, 96
        %v488 = vpop.permute.xlu0 %487
        %489 = vrot.lane.b32.xlu0 %v318, 96
        %v490 = vpop.permute.xlu0 %489
        %491 = vrot.lane.b32.xlu0 %v325, 96
        %v492 = vpop.permute.xlu0 %491
        %493 = vrot.lane.b32.xlu0 %v332, 96
        %v494 = vpop.permute.xlu0 %493
        %495 = vrot.lane.b32.xlu0 %v480, 96
        %v496 = vpop.permute.xlu0 %495
        %vm505 = vcmask 1044224
        %vm506 = vmand %vm505, %vm342
        %v507 = vld [vmem:[#allocation2] sm:$0xf]
        %v508 = vsel %vm506, %v482, %v507
        %509 = vst [vmem:[#allocation2] sm:$0xf] %v508
        %v510 = vld [vmem:[#allocation2 + $0xc] sm:$0xf]
        %v511 = vsel %vm506, %v484, %v510
        %512 = vst [vmem:[#allocation2 + $0xc] sm:$0xf] %v511
        %v513 = vld [vmem:[#allocation2 + $0x18] sm:$0xf]
        %v514 = vsel %vm506, %v486, %v513
        %515 = vst [vmem:[#allocation2 + $0x18] sm:$0xf] %v514
        %v516 = vld [vmem:[#allocation2 + $0x24] sm:$0xf]
        %v517 = vsel %vm506, %v488, %v516
        %518 = vst [vmem:[#allocation2 + $0x24] sm:$0xf] %v517
        %v519 = vld [vmem:[#allocation2 + $0x30] sm:$0xf]
        %v520 = vsel %vm506, %v490, %v519
        %521 = vst [vmem:[#allocation2 + $0x30] sm:$0xf] %v520
        %v522 = vld [vmem:[#allocation2 + $0x3c] sm:$0xf]
        %v523 = vsel %vm506, %v492, %v522
        %524 = vst [vmem:[#allocation2 + $0x3c] sm:$0xf] %v523
        %v525 = vld [vmem:[#allocation2 + $0x48] sm:$0xf]
        %v526 = vsel %vm506, %v494, %v525
        %527 = vst [vmem:[#allocation2 + $0x48] sm:$0xf] %v526
        %v528 = vld [vmem:[#allocation2 + $0x54] sm:$0xf]
        %v529 = vsel %vm506, %v496, %v528
        %530 = vst [vmem:[#allocation2 + $0x54] sm:$0xf] %v529
        %531 = vst.msk [vmem:[#allocation2 + $0x4] sm:$0xf] %vm268, %v259
        %532 = vst.msk [vmem:[#allocation2 + $0x10] sm:$0xf] %vm268, %v260
        %533 = vst.msk [vmem:[#allocation2 + $0x1c] sm:$0xf] %vm268, %v261
        %534 = vst.msk [vmem:[#allocation2 + $0x28] sm:$0xf] %vm268, %v262
        %535 = vst.msk [vmem:[#allocation2 + $0x34] sm:$0xf] %vm268, %v263
        %536 = vst.msk [vmem:[#allocation2 + $0x40] sm:$0xf] %vm268, %v264
        %537 = vst.msk [vmem:[#allocation2 + $0x4c] sm:$0xf] %vm268, %v265
        %538 = vst.msk [vmem:[#allocation2 + $0x58] sm:$0xf] %vm268, %v266
        %v539 = vrot.slane %v475, 4
        %v540 = vrot.slane %v478, 5
        %v541 = vor.u32 %v539, %v540
        %v542 = vrot.slane %v541, 4
        %543 = vrot.lane.b32.xlu0 %v404, 32
        %v544 = vpop.permute.xlu0 %543
        %545 = vrot.lane.b32.xlu0 %v408, 32
        %v546 = vpop.permute.xlu0 %545
        %547 = vrot.lane.b32.xlu0 %v412, 32
        %v548 = vpop.permute.xlu0 %547
        %549 = vrot.lane.b32.xlu0 %v416, 32
        %v550 = vpop.permute.xlu0 %549
        %551 = vrot.lane.b32.xlu0 %v420, 32
        %v552 = vpop.permute.xlu0 %551
        %553 = vrot.lane.b32.xlu0 %v424, 32
        %v554 = vpop.permute.xlu0 %553
        %555 = vrot.lane.b32.xlu0 %v428, 32
        %v556 = vpop.permute.xlu0 %555
        %557 = vrot.lane.b32.xlu0 %v542, 32
        %v558 = vpop.permute.xlu0 %557
        %vm567 = vcmask 519424
        %vm568 = vmand %vm567, %vm451
        %v569 = vld [vmem:[#allocation2 + $0x4] sm:$0xf]
        %v570 = vsel %vm568, %v544, %v569
        %571 = vst [vmem:[#allocation2 + $0x4] sm:$0xf] %v570
        %v572 = vld [vmem:[#allocation2 + $0x10] sm:$0xf]
        %v573 = vsel %vm568, %v546, %v572
        %574 = vst [vmem:[#allocation2 + $0x10] sm:$0xf] %v573
        %v575 = vld [vmem:[#allocation2 + $0x1c] sm:$0xf]
        %v576 = vsel %vm568, %v548, %v575
        %577 = vst [vmem:[#allocation2 + $0x1c] sm:$0xf] %v576
        %v578 = vld [vmem:[#allocation2 + $0x28] sm:$0xf]
        %v579 = vsel %vm568, %v550, %v578
        %580 = vst [vmem:[#allocation2 + $0x28] sm:$0xf] %v579
        %v581 = vld [vmem:[#allocation2 + $0x34] sm:$0xf]
        %v582 = vsel %vm568, %v552, %v581
        %583 = vst [vmem:[#allocation2 + $0x34] sm:$0xf] %v582
        %v584 = vld [vmem:[#allocation2 + $0x40] sm:$0xf]
        %v585 = vsel %vm568, %v554, %v584
        %586 = vst [vmem:[#allocation2 + $0x40] sm:$0xf] %v585
        %v587 = vld [vmem:[#allocation2 + $0x4c] sm:$0xf]
        %v588 = vsel %vm568, %v556, %v587
        %589 = vst [vmem:[#allocation2 + $0x4c] sm:$0xf] %v588
        %v590 = vld [vmem:[#allocation2 + $0x58] sm:$0xf]
        %v591 = vsel %vm568, %v558, %v590
        %592 = vst [vmem:[#allocation2 + $0x58] sm:$0xf] %v591
        %593 = vrot.lane.b32.xlu0 %v297, 64
        %v594 = vpop.permute.xlu0 %593
        %595 = vrot.lane.b32.xlu0 %v304, 64
        %v596 = vpop.permute.xlu0 %595
        %597 = vrot.lane.b32.xlu0 %v311, 64
        %v598 = vpop.permute.xlu0 %597
        %599 = vrot.lane.b32.xlu0 %v318, 64
        %v600 = vpop.permute.xlu0 %599
        %601 = vrot.lane.b32.xlu0 %v325, 64
        %v602 = vpop.permute.xlu0 %601
        %603 = vrot.lane.b32.xlu0 %v332, 64
        %v604 = vpop.permute.xlu0 %603
        %605 = vrot.lane.b32.xlu0 %v480, 64
        %v606 = vpop.permute.xlu0 %605
        %vm614 = vmand %vm450, %vm342
        %v615 = vld [vmem:[#allocation2 + $0x4] sm:$0xf]
        %v616 = vsel %vm614, %v594, %v615
        %617 = vst [vmem:[#allocation2 + $0x4] sm:$0xf] %v616
        %v618 = vld [vmem:[#allocation2 + $0x10] sm:$0xf]
        %v619 = vsel %vm614, %v596, %v618
        %620 = vst [vmem:[#allocation2 + $0x10] sm:$0xf] %v619
        %v621 = vld [vmem:[#allocation2 + $0x1c] sm:$0xf]
        %v622 = vsel %vm614, %v598, %v621
        %623 = vst [vmem:[#allocation2 + $0x1c] sm:$0xf] %v622
        %v624 = vld [vmem:[#allocation2 + $0x28] sm:$0xf]
        %v625 = vsel %vm614, %v600, %v624
        %626 = vst [vmem:[#allocation2 + $0x28] sm:$0xf] %v625
        %v627 = vld [vmem:[#allocation2 + $0x34] sm:$0xf]
        %v628 = vsel %vm614, %v602, %v627
        %629 = vst [vmem:[#allocation2 + $0x34] sm:$0xf] %v628
        %v630 = vld [vmem:[#allocation2 + $0x40] sm:$0xf]
        %v631 = vsel %vm614, %v604, %v630
        %632 = vst [vmem:[#allocation2 + $0x40] sm:$0xf] %v631
        %v633 = vld [vmem:[#allocation2 + $0x4c] sm:$0xf]
        %v634 = vsel %vm614, %v606, %v633
        %635 = vst [vmem:[#allocation2 + $0x4c] sm:$0xf] %v634
        %637 = vrot.lane.b32.xlu0 %v260, 96
        %v638 = vpop.permute.xlu0 %637
        %639 = vrot.lane.b32.xlu0 %v261, 96
        %v640 = vpop.permute.xlu0 %639
        %641 = vrot.lane.b32.xlu0 %v262, 96
        %v642 = vpop.permute.xlu0 %641
        %643 = vrot.lane.b32.xlu0 %v263, 96
        %v644 = vpop.permute.xlu0 %643
        %645 = vrot.lane.b32.xlu0 %v264, 96
        %v646 = vpop.permute.xlu0 %645
        %647 = vrot.lane.b32.xlu0 %v265, 96
        %v648 = vpop.permute.xlu0 %647
        %649 = vrot.lane.b32.xlu0 %v266, 96
        %v650 = vpop.permute.xlu0 %649
        %vm658 = vcmask 1044224
        %659 = vst.msk [vmem:[#allocation2 + $0x4] sm:$0xf] %vm658, %v638
        %660 = vst.msk [vmem:[#allocation2 + $0x10] sm:$0xf] %vm658, %v640
        %661 = vst.msk [vmem:[#allocation2 + $0x1c] sm:$0xf] %vm658, %v642
        %662 = vst.msk [vmem:[#allocation2 + $0x28] sm:$0xf] %vm658, %v644
        %663 = vst.msk [vmem:[#allocation2 + $0x34] sm:$0xf] %vm658, %v646
        %664 = vst.msk [vmem:[#allocation2 + $0x40] sm:$0xf] %vm658, %v648
        %665 = vst.msk [vmem:[#allocation2 + $0x4c] sm:$0xf] %vm658, %v650
        %vm673 = vmand %vm341, %vm451
        %v674 = vld [vmem:[#allocation2 + $0x8] sm:$0xf]
        %v675 = vsel %vm673, %v408, %v674
        %676 = vst [vmem:[#allocation2 + $0x8] sm:$0xf] %v675
        %v677 = vld [vmem:[#allocation2 + $0x14] sm:$0xf]
        %v678 = vsel %vm673, %v412, %v677
        %679 = vst [vmem:[#allocation2 + $0x14] sm:$0xf] %v678
        %v680 = vld [vmem:[#allocation2 + $0x20] sm:$0xf]
        %v681 = vsel %vm673, %v416, %v680
        %682 = vst [vmem:[#allocation2 + $0x20] sm:$0xf] %v681
        %v683 = vld [vmem:[#allocation2 + $0x2c] sm:$0xf]
        %v684 = vsel %vm673, %v420, %v683
        %685 = vst [vmem:[#allocation2 + $0x2c] sm:$0xf] %v684
        %v686 = vld [vmem:[#allocation2 + $0x38] sm:$0xf]
        %v687 = vsel %vm673, %v424, %v686
        %688 = vst [vmem:[#allocation2 + $0x38] sm:$0xf] %v687
        %v689 = vld [vmem:[#allocation2 + $0x44] sm:$0xf]
        %v690 = vsel %vm673, %v428, %v689
        %691 = vst [vmem:[#allocation2 + $0x44] sm:$0xf] %v690
        %v692 = vld [vmem:[#allocation2 + $0x50] sm:$0xf]
        %v693 = vsel %vm673, %v542, %v692
        %694 = vst [vmem:[#allocation2 + $0x50] sm:$0xf] %v693
        %v695 = vld [vmem:[#allocation2] sm:$0xff]
        %v696 = vld [vmem:[#allocation2 + $0x8] sm:$0xf]
        %v697 = vld [vmem:[#allocation2 + $0xc] sm:$0xff]
        %v698 = vld [vmem:[#allocation2 + $0x14] sm:$0xf]
        %v699 = vld [vmem:[#allocation2 + $0x18] sm:$0xff]
        %v700 = vld [vmem:[#allocation2 + $0x20] sm:$0xf]
        %v701 = vld [vmem:[#allocation2 + $0x24] sm:$0xff]
        %v702 = vld [vmem:[#allocation2 + $0x2c] sm:$0xf]
        %v703 = vld [vmem:[#allocation2 + $0x30] sm:$0xff]
        %v704 = vld [vmem:[#allocation2 + $0x38] sm:$0xf]
        %v705 = vld [vmem:[#allocation2 + $0x3c] sm:$0xff]
        %v706 = vld [vmem:[#allocation2 + $0x44] sm:$0xf]
        %v707 = vld [vmem:[#allocation2 + $0x48] sm:$0xff]
        %v708 = vld [vmem:[#allocation2 + $0x50] sm:$0xf]
        %v709 = vld [vmem:[#allocation2 + $0x54] sm:$0xff]
        %v710 = vld [vmem:[#allocation2 + $0x5c] sm:$0xf]
        %v711 = vld [vmem:[%s1] sm:$0xf]
        %v712 = vld [vmem:[%s1 + $0x4] sm:$0xf]
        %v713 = vld [vmem:[%s1 + $0x8] sm:$0xf]
        %v714 = vld [vmem:[%s1 + $0xc] sm:$0xf]
        %v715 = vld [vmem:[%s1 + $0x10] sm:$0xf]
        %v716 = vld [vmem:[%s1 + $0x14] sm:$0xf]
        %v717 = vld [vmem:[%s1 + $0x18] sm:$0xf]
        %v718 = vld [vmem:[%s1 + $0x1c] sm:$0xf]
        %v719 = vld [vmem:[%s1 + $0x20] sm:$0xf]
        %v720 = vld [vmem:[%s1 + $0x24] sm:$0xf]
        %v721 = vld [vmem:[%s1 + $0x28] sm:$0xf]
        %v722 = vld [vmem:[%s1 + $0x2c] sm:$0xf]
        %v723 = vld [vmem:[%s1 + $0x30] sm:$0xf]
        %v724 = vld [vmem:[%s1 + $0x34] sm:$0xf]
        %v725 = vld [vmem:[%s1 + $0x38] sm:$0xf]
        %v726 = vld [vmem:[%s1 + $0x3c] sm:$0xf]
        %v727 = vld [vmem:[%s1 + $0x40] sm:$0xf]
        %v728 = vld [vmem:[%s1 + $0x44] sm:$0xf]
        %v729 = vld [vmem:[%s1 + $0x48] sm:$0xf]
        %v730 = vld [vmem:[%s1 + $0x4c] sm:$0xf]
        %v731 = vld [vmem:[%s1 + $0x50] sm:$0xf]
        %v732 = vld [vmem:[%s1 + $0x54] sm:$0xf]
        %v733 = vld [vmem:[%s1 + $0x58] sm:$0xf]
        %v734 = vld [vmem:[%s1 + $0x5c] sm:$0xf]
        %v735 = vld [vmem:[%s1 + $0x60] sm:$0xf]
        %v736 = vld [vmem:[%s1 + $0x64] sm:$0xf]
        %v737 = vld [vmem:[%s1 + $0x68] sm:$0xf]
        %v738 = vld [vmem:[%s1 + $0x6c] sm:$0xf]
        %v739 = vld [vmem:[%s1 + $0x70] sm:$0xf]
        %v740 = vld [vmem:[%s1 + $0x74] sm:$0xf]
        %v741 = vld [vmem:[%s1 + $0x78] sm:$0xf]
        %v742 = vld [vmem:[%s1 + $0x7c] sm:$0xf]
        %v743 = vld [vmem:[%s1 + $0x80] sm:$0xf]
        %v744 = vld [vmem:[%s1 + $0x84] sm:$0xf]
        %v745 = vld [vmem:[%s1 + $0x88] sm:$0xf]
        %v746 = vld [vmem:[%s1 + $0x8c] sm:$0xf]
        %v747 = vld [vmem:[%s2] sm:$0x1]
        %v749 = vperm.slane %v747, 0
        %v767 = vunpack.c.l.b16 %v695
        %v768 = vunpack.c.h.b16 %v695
        %v769 = vunpack.c.l.b16 %v696
        %v770 = vunpack.c.l.b16 %v697
        %v771 = vunpack.c.h.b16 %v697
        %v772 = vunpack.c.l.b16 %v698
        %v773 = vunpack.c.l.b16 %v699
        %v774 = vunpack.c.h.b16 %v699
        %v775 = vunpack.c.l.b16 %v700
        %v776 = vunpack.c.l.b16 %v701
        %v777 = vunpack.c.h.b16 %v701
        %v778 = vunpack.c.l.b16 %v702
        %v779 = vunpack.c.l.b16 %v703
        %v780 = vunpack.c.h.b16 %v703
        %v781 = vunpack.c.l.b16 %v704
        %v782 = vunpack.c.l.b16 %v705
        %v783 = vunpack.c.h.b16 %v705
        %v784 = vunpack.c.l.b16 %v706
        %v785 = vunpack.c.l.b16 %v707
        %v786 = vunpack.c.h.b16 %v707
        %v787 = vunpack.c.l.b16 %v708
        %v788 = vunpack.c.l.b16 %v709
        %v789 = vunpack.c.h.b16 %v709
        %v790 = vunpack.c.l.b16 %v710
        %v791 = vpack.c.b16 %v770, %v767
        %v792 = vpack.c.b16 %v771, %v768
        %v793 = vpack.c.b16 %v772, %v769
        %v794 = vpack.c.b16 %v776, %v773
        %v795 = vpack.c.b16 %v777, %v774
        %v796 = vpack.c.b16 %v778, %v775
        %v797 = vpack.c.b16 %v782, %v779
        %v798 = vpack.c.b16 %v783, %v780
        %v799 = vpack.c.b16 %v784, %v781
        %v800 = vpack.c.b16 %v788, %v785
        %v801 = vpack.c.b16 %v789, %v786
        %v802 = vpack.c.b16 %v790, %v787
        %v847 = vunpack.c.l.b16 %v711
        %v848 = vunpack.c.l.b16 %v712
        %v849 = vunpack.c.l.b16 %v713
        %v850 = vunpack.c.l.b16 %v714
        %v851 = vunpack.c.l.b16 %v715
        %v852 = vunpack.c.l.b16 %v716
        %v853 = vunpack.c.l.b16 %v717
        %v854 = vunpack.c.l.b16 %v718
        %v855 = vunpack.c.l.b16 %v719
        %v856 = vunpack.c.l.b16 %v720
        %v857 = vunpack.c.l.b16 %v721
        %v858 = vunpack.c.l.b16 %v722
        %v859 = vunpack.c.l.b16 %v723
        %v860 = vunpack.c.l.b16 %v724
        %v861 = vunpack.c.l.b16 %v725
        %v862 = vunpack.c.l.b16 %v726
        %v863 = vunpack.c.l.b16 %v727
        %v864 = vunpack.c.l.b16 %v728
        %v865 = vunpack.c.l.b16 %v729
        %v866 = vunpack.c.l.b16 %v730
        %v867 = vunpack.c.l.b16 %v731
        %v868 = vunpack.c.l.b16 %v732
        %v869 = vunpack.c.l.b16 %v733
        %v870 = vunpack.c.l.b16 %v734
        %v871 = vunpack.c.l.b16 %v735
        %v872 = vunpack.c.l.b16 %v736
        %v873 = vunpack.c.l.b16 %v737
        %v874 = vunpack.c.l.b16 %v738
        %v875 = vunpack.c.l.b16 %v739
        %v876 = vunpack.c.l.b16 %v740
        %v877 = vunpack.c.l.b16 %v741
        %v878 = vunpack.c.l.b16 %v742
        %v879 = vunpack.c.l.b16 %v743
        %v880 = vunpack.c.l.b16 %v744
        %v881 = vunpack.c.l.b16 %v745
        %v882 = vunpack.c.l.b16 %v746
        %v883 = vpack.c.b16 %v848, %v847
        %v884 = vpack.c.b16 %v850, %v849
        %v885 = vpack.c.b16 %v852, %v851
        %v886 = vpack.c.b16 %v854, %v853
        %v887 = vpack.c.b16 %v856, %v855
        %v888 = vpack.c.b16 %v858, %v857
        %v889 = vpack.c.b16 %v860, %v859
        %v890 = vpack.c.b16 %v862, %v861
        %v891 = vpack.c.b16 %v864, %v863
        %v892 = vpack.c.b16 %v866, %v865
        %v893 = vpack.c.b16 %v868, %v867
        %v894 = vpack.c.b16 %v870, %v869
        %v895 = vpack.c.b16 %v872, %v871
        %v896 = vpack.c.b16 %v874, %v873
        %v897 = vpack.c.b16 %v876, %v875
        %v898 = vpack.c.b16 %v878, %v877
        %v899 = vpack.c.b16 %v880, %v879
        %v900 = vpack.c.b16 %v882, %v881
        %vm919 = vcmask 261120
        %v921 = vsel %vm919, %v793, 0
        %v924 = vsel %vm919, %v796, 0
        %v927 = vsel %vm919, %v799, 0
        %v930 = vsel %vm919, %v802, 0
        %932 = vmatpush.bf16.msra.mxu0 %v890
        %933 = vmatpush.bf16.msra.mxu0 %v889
        %934 = vmatpush.bf16.msra.mxu0 %v888
        %935 = vmatpush.bf16.msra.mxu0 %v887
        %936 = vmatpush.bf16.msra.mxu0 %v886
        %937 = vmatpush.bf16.msra.mxu0 %v885
        %938 = vmatpush.bf16.msra.mxu0 %v884
        %939 = vmatpush.bf16.msra.mxu0 %v883
        %940 = vmatmul.bf16.gmra.mxu0 %v791
        %v941 = vpop.f32.mrf.mxu0
        %v942 = vadd.f32 %v749, %v941
        %v943 = vpop.f32.mrf.mxu0
        %v944 = vadd.f32 %v749, %v943
        %945 = vmatmul.bf16.gmra.mxu0 %v794
        %v946 = vpop.f32.mrf.mxu0
        %v947 = vadd.f32 %v749, %v946
        %v948 = vpop.f32.mrf.mxu0
        %v949 = vadd.f32 %v749, %v948
        %950 = vmatmul.bf16.gmra.mxu0 %v797
        %v951 = vpop.f32.mrf.mxu0
        %v952 = vadd.f32 %v749, %v951
        %v953 = vpop.f32.mrf.mxu0
        %v954 = vadd.f32 %v749, %v953
        %955 = vmatmul.bf16.gmra.mxu0 %v800
        %v956 = vpop.f32.mrf.mxu0
        %v957 = vadd.f32 %v749, %v956
        %v958 = vpop.f32.mrf.mxu0
        %v959 = vadd.f32 %v749, %v958
        %960 = vdwg.mxu0
        %961 = vmatpush.bf16.msra.mxu0 %v898
        %962 = vmatpush.bf16.msra.mxu0 %v897
        %963 = vmatpush.bf16.msra.mxu0 %v896
        %964 = vmatpush.bf16.msra.mxu0 %v895
        %965 = vmatpush.bf16.msra.mxu0 %v894
        %966 = vmatpush.bf16.msra.mxu0 %v893
        %967 = vmatpush.bf16.msra.mxu0 %v892
        %968 = vmatpush.bf16.msra.mxu0 %v891
        %969 = vmatmul.bf16.gmra.mxu0 %v792
        %v970 = vpop.f32.mrf.mxu0
        %v971 = vadd.f32 %v942, %v970
        %v972 = vpop.f32.mrf.mxu0
        %v973 = vadd.f32 %v944, %v972
        %974 = vmatmul.bf16.gmra.mxu0 %v795
        %v975 = vpop.f32.mrf.mxu0
        %v976 = vadd.f32 %v947, %v975
        %v977 = vpop.f32.mrf.mxu0
        %v978 = vadd.f32 %v949, %v977
        %979 = vmatmul.bf16.gmra.mxu0 %v798
        %v980 = vpop.f32.mrf.mxu0
        %v981 = vadd.f32 %v952, %v980
        %v982 = vpop.f32.mrf.mxu0
        %v983 = vadd.f32 %v954, %v982
        %984 = vmatmul.bf16.gmra.mxu0 %v801
        %v985 = vpop.f32.mrf.mxu0
        %v986 = vadd.f32 %v957, %v985
        %v987 = vpop.f32.mrf.mxu0
        %v988 = vadd.f32 %v959, %v987
        %989 = vdwg.mxu0
        %990 = vmatpush.bf16.msra.mxu0 0
        %991 = vmatpush.bf16.msra.mxu0 0
        %992 = vmatpush.bf16.msra.mxu0 0
        %993 = vmatpush.bf16.msra.mxu0 0
        %994 = vmatpush.bf16.msra.mxu0 0
        %995 = vmatpush.bf16.msra.mxu0 0
        %996 = vmatpush.bf16.msra.mxu0 %v900
        %997 = vmatpush.bf16.msra.mxu0 %v899
        %998 = vmatmul.bf16.gmra.mxu0 %v921
        %v999 = vpop.f32.mrf.mxu0
        %v1000 = vadd.f32 %v971, %v999
        %v1001 = vpop.f32.mrf.mxu0
        %v1002 = vadd.f32 %v973, %v1001
        %1003 = vmatmul.bf16.gmra.mxu0 %v924
        %v1004 = vpop.f32.mrf.mxu0
        %v1005 = vadd.f32 %v976, %v1004
        %v1006 = vpop.f32.mrf.mxu0
        %v1007 = vadd.f32 %v978, %v1006
        %1008 = vmatmul.bf16.gmra.mxu0 %v927
        %v1009 = vpop.f32.mrf.mxu0
        %v1010 = vadd.f32 %v981, %v1009
        %v1011 = vpop.f32.mrf.mxu0
        %v1012 = vadd.f32 %v983, %v1011
        %1013 = vmatmul.bf16.gmra.mxu0 %v930
        %v1014 = vpop.f32.mrf.mxu0
        %v1015 = vadd.f32 %v986, %v1014
        %v1016 = vpop.f32.mrf.mxu0
        %v1017 = vadd.f32 %v988, %v1016
        %1018 = vdwg.mxu0
        %v1019 = vmax.f32 %v1000, 0.0
        %v1020 = vmax.f32 %v1002, 0.0
        %v1021 = vmax.f32 %v1005, 0.0
        %v1022 = vmax.f32 %v1007, 0.0
        %v1023 = vmax.f32 %v1010, 0.0
        %v1024 = vmax.f32 %v1012, 0.0
        %v1025 = vmax.f32 %v1015, 0.0
        %v1026 = vmax.f32 %v1017, 0.0
        %v1027 = vpack.c.bf16 %v1020, %v1019
        %v1028 = vpack.c.bf16 %v1022, %v1021
        %v1029 = vpack.c.bf16 %v1024, %v1023
        %v1030 = vpack.c.bf16 %v1026, %v1025
        %v1031 = vld [vmem:[%s3] sm:$0xf]
        %v1032 = vld [vmem:[%s3 + $0x4] sm:$0xf]
        %v1033 = vld [vmem:[%s3 + $0x8] sm:$0xf]
        %v1034 = vld [vmem:[%s3 + $0xc] sm:$0xf]
        %v1035 = vld [vmem:[%s4] sm:$0x1]
        %v1037 = vperm.slane %v1035, 0
        %v1043 = vunpack.c.l.b16 %v1031
        %v1044 = vunpack.c.l.b16 %v1032
        %v1045 = vunpack.c.l.b16 %v1033
        %v1046 = vunpack.c.l.b16 %v1034
        %v1047 = vpack.c.b16 %v1044, %v1043
        %v1048 = vpack.c.b16 %v1046, %v1045
        %v1052 = vsel %vm919, %v1027, 0
        %v1055 = vsel %vm919, %v1028, 0
        %v1058 = vsel %vm919, %v1029, 0
        %v1061 = vsel %vm919, %v1030, 0
        %1063 = vmatpush.bf16.msra.mxu0 0
        %1064 = vmatpush.bf16.msra.mxu0 0
        %1065 = vmatpush.bf16.msra.mxu0 0
        %1066 = vmatpush.bf16.msra.mxu0 0
        %1067 = vmatpush.bf16.msra.mxu0 0
        %1068 = vmatpush.bf16.msra.mxu0 0
        %1069 = vmatpush.bf16.msra.mxu0 %v1048
        %1070 = vmatpush.bf16.msra.mxu0 %v1047
        %1071 = vmatmul.bf16.gmra.mxu0 %v1052
        %v1072 = vpop.f32.mrf.mxu0
        %v1073 = vadd.f32 %v1037, %v1072
        %v1074 = vpop.f32.mrf.mxu0
        %v1075 = vadd.f32 %v1037, %v1074
        %1076 = vmatmul.bf16.gmra.mxu0 %v1055
        %v1077 = vpop.f32.mrf.mxu0
        %v1078 = vadd.f32 %v1037, %v1077
        %v1079 = vpop.f32.mrf.mxu0
        %v1080 = vadd.f32 %v1037, %v1079
        %1081 = vmatmul.bf16.gmra.mxu0 %v1058
        %v1082 = vpop.f32.mrf.mxu0
        %v1083 = vadd.f32 %v1037, %v1082
        %v1084 = vpop.f32.mrf.mxu0
        %v1085 = vadd.f32 %v1037, %v1084
        %1086 = vmatmul.bf16.gmra.mxu0 %v1061
        %v1087 = vpop.f32.mrf.mxu0
        %v1088 = vadd.f32 %v1037, %v1087
        %v1089 = vpop.f32.mrf.mxu0
        %v1090 = vadd.f32 %v1037, %v1089
        %1091 = vdwg.mxu0
        %v1092 = vmin.f32 %v1073, 4.1351666
        %v1093 = vmin.f32 %v1075, 4.1351666
        %v1094 = vmin.f32 %v1078, 4.1351666
        %v1095 = vmin.f32 %v1080, 4.1351666
        %v1096 = vmin.f32 %v1083, 4.1351666
        %v1097 = vmin.f32 %v1085, 4.1351666
        %v1098 = vmin.f32 %v1088, 4.1351666
        %v1099 = vmin.f32 %v1090, 4.1351666
        %v1100 = vld [vmem:[%s5] sm:$0xff]
        %v1101 = vld [vmem:[%s5 + $0x8] sm:$0xff]
        %v1102 = vld [vmem:[%s5 + $0x10] sm:$0xff]
        %v1103 = vld [vmem:[%s5 + $0x18] sm:$0xff]
        %v1104 = vld [vmem:[%s5 + $0x20] sm:$0xff]
        %v1105 = vld [vmem:[%s5 + $0x28] sm:$0xff]
        %v1106 = vld [vmem:[%s5 + $0x30] sm:$0xff]
        %v1107 = vld [vmem:[%s5 + $0x38] sm:$0xff]
        %1116 = vrot.lane.b32.xlu0 %v1100, 122
        %v1117 = vpop.permute.xlu0 %1116
        %1118 = vrot.lane.b32.xlu0 %v1101, 122
        %v1119 = vpop.permute.xlu0 %1118
        %1120 = vrot.lane.b32.xlu0 %v1102, 122
        %v1121 = vpop.permute.xlu0 %1120
        %1122 = vrot.lane.b32.xlu0 %v1103, 122
        %v1123 = vpop.permute.xlu0 %1122
        %1124 = vrot.lane.b32.xlu0 %v1104, 122
        %v1125 = vpop.permute.xlu0 %1124
        %1126 = vrot.lane.b32.xlu0 %v1105, 122
        %v1127 = vpop.permute.xlu0 %1126
        %1128 = vrot.lane.b32.xlu0 %v1106, 122
        %v1129 = vpop.permute.xlu0 %1128
        %1130 = vrot.lane.b32.xlu0 %v1107, 122
        %v1131 = vpop.permute.xlu0 %1130
        %v1140 = vmul.f32 %v1073, %v1117
        %v1141 = vmul.f32 %v1075, %v1119
        %v1142 = vmul.f32 %v1078, %v1121
        %v1143 = vmul.f32 %v1080, %v1123
        %v1144 = vmul.f32 %v1083, %v1125
        %v1145 = vmul.f32 %v1085, %v1127
        %v1146 = vmul.f32 %v1088, %v1129
        %v1147 = vmul.f32 %v1090, %v1131
        %v1148 = vadd.f32 %v1140, %v1100
        %v1149 = vadd.f32 %v1141, %v1101
        %v1150 = vadd.f32 %v1142, %v1102
        %v1151 = vadd.f32 %v1143, %v1103
        %v1152 = vadd.f32 %v1144, %v1104
        %v1153 = vadd.f32 %v1145, %v1105
        %v1154 = vadd.f32 %v1146, %v1106
        %v1155 = vadd.f32 %v1147, %v1107
        %v1156 = vmul.f32 %v1092, 1.442695
        %v1157 = vpow.pop %v1156
        %v1158 = vmul.f32 %v1093, 1.442695
        %v1159 = vpow.pop %v1158
        %v1160 = vmul.f32 %v1094, 1.442695
        %v1161 = vpow.pop %v1160
        %v1162 = vmul.f32 %v1095, 1.442695
        %v1163 = vpow.pop %v1162
        %v1164 = vmul.f32 %v1096, 1.442695
        %v1165 = vpow.pop %v1164
        %v1166 = vmul.f32 %v1097, 1.442695
        %v1167 = vpow.pop %v1166
        %v1168 = vmul.f32 %v1098, 1.442695
        %v1169 = vpow.pop %v1168
        %v1170 = vmul.f32 %v1099, 1.442695
        %v1171 = vpow.pop %v1170
        %v1172 = vmul.f32 %v1157, %v1100
        %v1173 = vmul.f32 %v1159, %v1101
        %v1174 = vmul.f32 %v1161, %v1102
        %v1175 = vmul.f32 %v1163, %v1103
        %v1176 = vmul.f32 %v1165, %v1104
        %v1177 = vmul.f32 %v1167, %v1105
        %v1178 = vmul.f32 %v1169, %v1106
        %v1179 = vmul.f32 %v1171, %v1107
        %v1180 = vmul.f32 %v1172, 0.5
        %v1181 = vmul.f32 %v1173, 0.5
        %v1182 = vmul.f32 %v1174, 0.5
        %v1183 = vmul.f32 %v1175, 0.5
        %v1184 = vmul.f32 %v1176, 0.5
        %v1185 = vmul.f32 %v1177, 0.5
        %v1186 = vmul.f32 %v1178, 0.5
        %v1187 = vmul.f32 %v1179, 0.5
        %1196 = vrot.lane.b32.xlu0 %v1180, 122
        %v1197 = vpop.permute.xlu0 %1196
        %1198 = vrot.lane.b32.xlu0 %v1181, 122
        %v1199 = vpop.permute.xlu0 %1198
        %1200 = vrot.lane.b32.xlu0 %v1182, 122
        %v1201 = vpop.permute.xlu0 %1200
        %1202 = vrot.lane.b32.xlu0 %v1183, 122
        %v1203 = vpop.permute.xlu0 %1202
        %1204 = vrot.lane.b32.xlu0 %v1184, 122
        %v1205 = vpop.permute.xlu0 %1204
        %1206 = vrot.lane.b32.xlu0 %v1185, 122
        %v1207 = vpop.permute.xlu0 %1206
        %1208 = vrot.lane.b32.xlu0 %v1186, 122
        %v1209 = vpop.permute.xlu0 %1208
        %1210 = vrot.lane.b32.xlu0 %v1187, 122
        %v1211 = vpop.permute.xlu0 %1210
        %v1220 = vsub.f32 %v1148, %v1197
        %v1221 = vsub.f32 %v1149, %v1199
        %v1222 = vsub.f32 %v1150, %v1201
        %v1223 = vsub.f32 %v1151, %v1203
        %v1224 = vsub.f32 %v1152, %v1205
        %v1225 = vsub.f32 %v1153, %v1207
        %v1226 = vsub.f32 %v1154, %v1209
        %v1227 = vsub.f32 %v1155, %v1211
        %v1228 = vmax.f32 %v1220, 0.0
        %v1229 = vmax.f32 %v1221, 0.0
        %v1230 = vmax.f32 %v1222, 0.0
        %v1231 = vmax.f32 %v1223, 0.0
        %v1232 = vmax.f32 %v1224, 0.0
        %v1233 = vmax.f32 %v1225, 0.0
        %v1234 = vmax.f32 %v1226, 0.0
        %v1235 = vmax.f32 %v1227, 0.0
        %v1236 = vmin.f32 %v1228, 64.0
        %v1237 = vmin.f32 %v1229, 64.0
        %v1238 = vmin.f32 %v1230, 64.0
        %v1239 = vmin.f32 %v1231, 64.0
        %v1240 = vmin.f32 %v1232, 64.0
        %v1241 = vmin.f32 %v1233, 64.0
        %v1242 = vmin.f32 %v1234, 64.0
        %v1243 = vmin.f32 %v1235, 64.0
        %v1244 = vadd.f32 %v1148, %v1197
        %v1245 = vadd.f32 %v1149, %v1199
        %v1246 = vadd.f32 %v1150, %v1201
        %v1247 = vadd.f32 %v1151, %v1203
        %v1248 = vadd.f32 %v1152, %v1205
        %v1249 = vadd.f32 %v1153, %v1207
        %v1250 = vadd.f32 %v1154, %v1209
        %v1251 = vadd.f32 %v1155, %v1211
        %v1252 = vmax.f32 %v1244, 0.0
        %v1253 = vmax.f32 %v1245, 0.0
        %v1254 = vmax.f32 %v1246, 0.0
        %v1255 = vmax.f32 %v1247, 0.0
        %v1256 = vmax.f32 %v1248, 0.0
        %v1257 = vmax.f32 %v1249, 0.0
        %v1258 = vmax.f32 %v1250, 0.0
        %v1259 = vmax.f32 %v1251, 0.0
        %v1260 = vmin.f32 %v1252, 64.0
        %v1261 = vmin.f32 %v1253, 64.0
        %v1262 = vmin.f32 %v1254, 64.0
        %v1263 = vmin.f32 %v1255, 64.0
        %v1264 = vmin.f32 %v1256, 64.0
        %v1265 = vmin.f32 %v1257, 64.0
        %v1266 = vmin.f32 %v1258, 64.0
        %v1267 = vmin.f32 %v1259, 64.0
        %v1268 = vsub.f32 %v1260, %v1236
        %v1269 = vsub.f32 %v1261, %v1237
        %v1270 = vsub.f32 %v1262, %v1238
        %v1271 = vsub.f32 %v1263, %v1239
        %v1272 = vsub.f32 %v1264, %v1240
        %v1273 = vsub.f32 %v1265, %v1241
        %v1274 = vsub.f32 %v1266, %v1242
        %v1275 = vsub.f32 %v1267, %v1243
        %vm1276 = vcmp.ge.f32.partialorder %v1268, 1.0
        %vm1277 = vcmp.ge.f32.partialorder %v1269, 1.0
        %vm1278 = vcmp.ge.f32.partialorder %v1270, 1.0
        %vm1279 = vcmp.ge.f32.partialorder %v1271, 1.0
        %vm1280 = vcmp.ge.f32.partialorder %v1272, 1.0
        %vm1281 = vcmp.ge.f32.partialorder %v1273, 1.0
        %vm1282 = vcmp.ge.f32.partialorder %v1274, 1.0
        %vm1283 = vcmp.ge.f32.partialorder %v1275, 1.0
        %v1284 = vsel %vm1276, 1, 0
        %v1285 = vsel %vm1277, 1, 0
        %v1286 = vsel %vm1278, 1, 0
        %v1287 = vsel %vm1279, 1, 0
        %v1288 = vsel %vm1280, 1, 0
        %v1289 = vsel %vm1281, 1, 0
        %v1290 = vsel %vm1282, 1, 0
        %v1291 = vsel %vm1283, 1, 0
        %1292 = vrot.lane.b32.xlu0 %v1284, 125
        %v1293 = vpop.permute.xlu0 %1292
        %1294 = vrot.lane.b32.xlu0 %v1285, 125
        %v1295 = vpop.permute.xlu0 %1294
        %1296 = vrot.lane.b32.xlu0 %v1286, 125
        %v1297 = vpop.permute.xlu0 %1296
        %1298 = vrot.lane.b32.xlu0 %v1287, 125
        %v1299 = vpop.permute.xlu0 %1298
        %1300 = vrot.lane.b32.xlu0 %v1288, 125
        %v1301 = vpop.permute.xlu0 %1300
        %1302 = vrot.lane.b32.xlu0 %v1289, 125
        %v1303 = vpop.permute.xlu0 %1302
        %1304 = vrot.lane.b32.xlu0 %v1290, 125
        %v1305 = vpop.permute.xlu0 %1304
        %1306 = vrot.lane.b32.xlu0 %v1291, 125
        %v1307 = vpop.permute.xlu0 %1306
        %vm1308 = vcmp.ne.s32.totalorder %v1293, 0
        %vm1309 = vcmp.ne.s32.totalorder %v1295, 0
        %vm1310 = vcmp.ne.s32.totalorder %v1297, 0
        %vm1311 = vcmp.ne.s32.totalorder %v1299, 0
        %vm1312 = vcmp.ne.s32.totalorder %v1301, 0
        %vm1313 = vcmp.ne.s32.totalorder %v1303, 0
        %vm1314 = vcmp.ne.s32.totalorder %v1305, 0
        %vm1315 = vcmp.ne.s32.totalorder %v1307, 0
        %vm1316 = vmand %vm1276, %vm1308
        %vm1317 = vmand %vm1277, %vm1309
        %vm1318 = vmand %vm1278, %vm1310
        %vm1319 = vmand %vm1279, %vm1311
        %vm1320 = vmand %vm1280, %vm1312
        %vm1321 = vmand %vm1281, %vm1313
        %vm1322 = vmand %vm1282, %vm1314
        %vm1323 = vmand %vm1283, %vm1315
        %v1324 = vxor.u32 %v1073, 2147483648
        %v1325 = vxor.u32 %v1075, 2147483648
        %v1326 = vxor.u32 %v1078, 2147483648
        %v1327 = vxor.u32 %v1080, 2147483648
        %v1328 = vxor.u32 %v1083, 2147483648
        %v1329 = vxor.u32 %v1085, 2147483648
        %v1330 = vxor.u32 %v1088, 2147483648
        %v1331 = vxor.u32 %v1090, 2147483648
        %v1332 = vmul.f32 %v1324, 1.442695
        %v1333 = vpow.pop %v1332
        %v1334 = vmul.f32 %v1325, 1.442695
        %v1335 = vpow.pop %v1334
        %v1336 = vmul.f32 %v1326, 1.442695
        %v1337 = vpow.pop %v1336
        %v1338 = vmul.f32 %v1327, 1.442695
        %v1339 = vpow.pop %v1338
        %v1340 = vmul.f32 %v1328, 1.442695
        %v1341 = vpow.pop %v1340
        %v1342 = vmul.f32 %v1329, 1.442695
        %v1343 = vpow.pop %v1342
        %v1344 = vmul.f32 %v1330, 1.442695
        %v1345 = vpow.pop %v1344
        %v1346 = vmul.f32 %v1331, 1.442695
        %v1347 = vpow.pop %v1346
        %v1348 = vadd.f32 %v1333, 1.0
        %v1349 = vadd.f32 %v1335, 1.0
        %v1350 = vadd.f32 %v1337, 1.0
        %v1351 = vadd.f32 %v1339, 1.0
        %v1352 = vadd.f32 %v1341, 1.0
        %v1353 = vadd.f32 %v1343, 1.0
        %v1354 = vadd.f32 %v1345, 1.0
        %v1355 = vadd.f32 %v1347, 1.0
        %v1356 = vrcp.pop %v1348
        %v1357 = vmul.f32 %v1348, %v1356
        %v1358 = vsub.f32 1.0, %v1357
        %v1359 = vmul.f32 %v1356, %v1358
        %v1360 = vadd.f32 %v1356, %v1359
        %vm1361 = vweird.f32 %v1348
        %vm1362 = vweird.f32 %v1356
        %vm1363 = vmor %vm1361, %vm1362
        %v1364 = vsel %vm1363, %v1356, %v1360
        %v1365 = vand.u32 2147483647, %v1348
        %vm1366 = vcmp.eq.f32.partialorder %v1365, 8.507059e+37
        %v1367 = vand.u32 %v1348, 2147483648
        %v1368 = vor.u32 1.1754944e-38, %v1367
        %v1369 = vsel %vm1366, %v1368, %v1364
        %v1370 = vmul.f32 1.0, %v1369
        %v1371 = vrcp.pop %v1349
        %v1372 = vmul.f32 %v1349, %v1371
        %v1373 = vsub.f32 1.0, %v1372
        %v1374 = vmul.f32 %v1371, %v1373
        %v1375 = vadd.f32 %v1371, %v1374
        %vm1376 = vweird.f32 %v1349
        %vm1377 = vweird.f32 %v1371
        %vm1378 = vmor %vm1376, %vm1377
        %v1379 = vsel %vm1378, %v1371, %v1375
        %v1380 = vand.u32 2147483647, %v1349
        %vm1381 = vcmp.eq.f32.partialorder %v1380, 8.507059e+37
        %v1382 = vand.u32 %v1349, 2147483648
        %v1383 = vor.u32 1.1754944e-38, %v1382
        %v1384 = vsel %vm1381, %v1383, %v1379
        %v1385 = vmul.f32 1.0, %v1384
        %v1386 = vrcp.pop %v1350
        %v1387 = vmul.f32 %v1350, %v1386
        %v1388 = vsub.f32 1.0, %v1387
        %v1389 = vmul.f32 %v1386, %v1388
        %v1390 = vadd.f32 %v1386, %v1389
        %vm1391 = vweird.f32 %v1350
        %vm1392 = vweird.f32 %v1386
        %vm1393 = vmor %vm1391, %vm1392
        %v1394 = vsel %vm1393, %v1386, %v1390
        %v1395 = vand.u32 2147483647, %v1350
        %vm1396 = vcmp.eq.f32.partialorder %v1395, 8.507059e+37
        %v1397 = vand.u32 %v1350, 2147483648
        %v1398 = vor.u32 1.1754944e-38, %v1397
        %v1399 = vsel %vm1396, %v1398, %v1394
        %v1400 = vmul.f32 1.0, %v1399
        %v1401 = vrcp.pop %v1351
        %v1402 = vmul.f32 %v1351, %v1401
        %v1403 = vsub.f32 1.0, %v1402
        %v1404 = vmul.f32 %v1401, %v1403
        %v1405 = vadd.f32 %v1401, %v1404
        %vm1406 = vweird.f32 %v1351
        %vm1407 = vweird.f32 %v1401
        %vm1408 = vmor %vm1406, %vm1407
        %v1409 = vsel %vm1408, %v1401, %v1405
        %v1410 = vand.u32 2147483647, %v1351
        %vm1411 = vcmp.eq.f32.partialorder %v1410, 8.507059e+37
        %v1412 = vand.u32 %v1351, 2147483648
        %v1413 = vor.u32 1.1754944e-38, %v1412
        %v1414 = vsel %vm1411, %v1413, %v1409
        %v1415 = vmul.f32 1.0, %v1414
        %v1416 = vrcp.pop %v1352
        %v1417 = vmul.f32 %v1352, %v1416
        %v1418 = vsub.f32 1.0, %v1417
        %v1419 = vmul.f32 %v1416, %v1418
        %v1420 = vadd.f32 %v1416, %v1419
        %vm1421 = vweird.f32 %v1352
        %vm1422 = vweird.f32 %v1416
        %vm1423 = vmor %vm1421, %vm1422
        %v1424 = vsel %vm1423, %v1416, %v1420
        %v1425 = vand.u32 2147483647, %v1352
        %vm1426 = vcmp.eq.f32.partialorder %v1425, 8.507059e+37
        %v1427 = vand.u32 %v1352, 2147483648
        %v1428 = vor.u32 1.1754944e-38, %v1427
        %v1429 = vsel %vm1426, %v1428, %v1424
        %v1430 = vmul.f32 1.0, %v1429
        %v1431 = vrcp.pop %v1353
        %v1432 = vmul.f32 %v1353, %v1431
        %v1433 = vsub.f32 1.0, %v1432
        %v1434 = vmul.f32 %v1431, %v1433
        %v1435 = vadd.f32 %v1431, %v1434
        %vm1436 = vweird.f32 %v1353
        %vm1437 = vweird.f32 %v1431
        %vm1438 = vmor %vm1436, %vm1437
        %v1439 = vsel %vm1438, %v1431, %v1435
        %v1440 = vand.u32 2147483647, %v1353
        %vm1441 = vcmp.eq.f32.partialorder %v1440, 8.507059e+37
        %v1442 = vand.u32 %v1353, 2147483648
        %v1443 = vor.u32 1.1754944e-38, %v1442
        %v1444 = vsel %vm1441, %v1443, %v1439
        %v1445 = vmul.f32 1.0, %v1444
        %v1446 = vrcp.pop %v1354
        %v1447 = vmul.f32 %v1354, %v1446
        %v1448 = vsub.f32 1.0, %v1447
        %v1449 = vmul.f32 %v1446, %v1448
        %v1450 = vadd.f32 %v1446, %v1449
        %vm1451 = vweird.f32 %v1354
        %vm1452 = vweird.f32 %v1446
        %vm1453 = vmor %vm1451, %vm1452
        %v1454 = vsel %vm1453, %v1446, %v1450
        %v1455 = vand.u32 2147483647, %v1354
        %vm1456 = vcmp.eq.f32.partialorder %v1455, 8.507059e+37
        %v1457 = vand.u32 %v1354, 2147483648
        %v1458 = vor.u32 1.1754944e-38, %v1457
        %v1459 = vsel %vm1456, %v1458, %v1454
        %v1460 = vmul.f32 1.0, %v1459
        %v1461 = vrcp.pop %v1355
        %v1462 = vmul.f32 %v1355, %v1461
        %v1463 = vsub.f32 1.0, %v1462
        %v1464 = vmul.f32 %v1461, %v1463
        %v1465 = vadd.f32 %v1461, %v1464
        %vm1466 = vweird.f32 %v1355
        %vm1467 = vweird.f32 %v1461
        %vm1468 = vmor %vm1466, %vm1467
        %v1469 = vsel %vm1468, %v1461, %v1465
        %v1470 = vand.u32 2147483647, %v1355
        %vm1471 = vcmp.eq.f32.partialorder %v1470, 8.507059e+37
        %v1472 = vand.u32 %v1355, 2147483648
        %v1473 = vor.u32 1.1754944e-38, %v1472
        %v1474 = vsel %vm1471, %v1473, %v1469
        %v1475 = vmul.f32 1.0, %v1474
        %1484 = vrot.lane.b32.xlu0 %v1370, 116
        %v1485 = vpop.permute.xlu0 %1484
        %1486 = vrot.lane.b32.xlu0 %v1385, 116
        %v1487 = vpop.permute.xlu0 %1486
        %1488 = vrot.lane.b32.xlu0 %v1400, 116
        %v1489 = vpop.permute.xlu0 %1488
        %1490 = vrot.lane.b32.xlu0 %v1415, 116
        %v1491 = vpop.permute.xlu0 %1490
        %1492 = vrot.lane.b32.xlu0 %v1430, 116
        %v1493 = vpop.permute.xlu0 %1492
        %1494 = vrot.lane.b32.xlu0 %v1445, 116
        %v1495 = vpop.permute.xlu0 %1494
        %1496 = vrot.lane.b32.xlu0 %v1460, 116
        %v1497 = vpop.permute.xlu0 %1496
        %1498 = vrot.lane.b32.xlu0 %v1475, 116
        %v1499 = vpop.permute.xlu0 %1498
        %v1508 = vsel %vm1316, %v1485, -1.0
        %v1509 = vsel %vm1317, %v1487, -1.0
        %v1510 = vsel %vm1318, %v1489, -1.0
        %v1511 = vsel %vm1319, %v1491, -1.0
        %v1512 = vsel %vm1320, %v1493, -1.0
        %v1513 = vsel %vm1321, %v1495, -1.0
        %v1514 = vsel %vm1322, %v1497, -1.0
        %v1515 = vsel %vm1323, %v1499, -1.0
        %1524 = vrot.lane.b32.xlu0 %v1260, 6
        %v1525 = vpop.permute.xlu0 %1524
        %1526 = vrot.lane.b32.xlu0 %v1261, 6
        %v1527 = vpop.permute.xlu0 %1526
        %1528 = vrot.lane.b32.xlu0 %v1262, 6
        %v1529 = vpop.permute.xlu0 %1528
        %1530 = vrot.lane.b32.xlu0 %v1263, 6
        %v1531 = vpop.permute.xlu0 %1530
        %1532 = vrot.lane.b32.xlu0 %v1264, 6
        %v1533 = vpop.permute.xlu0 %1532
        %1534 = vrot.lane.b32.xlu0 %v1265, 6
        %v1535 = vpop.permute.xlu0 %1534
        %1536 = vrot.lane.b32.xlu0 %v1266, 6
        %v1537 = vpop.permute.xlu0 %1536
        %1538 = vrot.lane.b32.xlu0 %v1267, 6
        %v1539 = vpop.permute.xlu0 %1538
        %1556 = vrot.lane.b32.xlu0 %v1508, 12
        %v1557 = vpop.permute.xlu0 %1556
        %1558 = vrot.lane.b32.xlu0 %v1509, 12
        %v1559 = vpop.permute.xlu0 %1558
        %1560 = vrot.lane.b32.xlu0 %v1510, 12
        %v1561 = vpop.permute.xlu0 %1560
        %1562 = vrot.lane.b32.xlu0 %v1511, 12
        %v1563 = vpop.permute.xlu0 %1562
        %1564 = vrot.lane.b32.xlu0 %v1512, 12
        %v1565 = vpop.permute.xlu0 %1564
        %1566 = vrot.lane.b32.xlu0 %v1513, 12
        %v1567 = vpop.permute.xlu0 %1566
        %1568 = vrot.lane.b32.xlu0 %v1514, 12
        %v1569 = vpop.permute.xlu0 %1568
        %1570 = vrot.lane.b32.xlu0 %v1515, 12
        %v1571 = vpop.permute.xlu0 %1570
        %vm1580 = vcmask 48128
        %v1581 = vsel %vm1580, %v1236, %v1525
        %v1582 = vsel %vm1580, %v1237, %v1527
        %v1583 = vsel %vm1580, %v1238, %v1529
        %v1584 = vsel %vm1580, %v1239, %v1531
        %v1585 = vsel %vm1580, %v1240, %v1533
        %v1586 = vsel %vm1580, %v1241, %v1535
        %v1587 = vsel %vm1580, %v1242, %v1537
        %v1588 = vsel %vm1580, %v1243, %v1539
        %vm1589 = vcmask 72704
        %v1590 = vsel %vm1589, %v1581, %v1525
        %v1591 = vsel %vm1589, %v1582, %v1527
        %v1592 = vsel %vm1589, %v1583, %v1529
        %v1593 = vsel %vm1589, %v1584, %v1531
        %v1594 = vsel %vm1589, %v1585, %v1533
        %v1595 = vsel %vm1589, %v1586, %v1535
        %v1596 = vsel %vm1589, %v1587, %v1537
        %v1597 = vsel %vm1589, %v1588, %v1539
        %vm1598 = vcmask 97280
        %v1599 = vsel %vm1598, %v1590, %v1557
        %v1600 = vsel %vm1598, %v1591, %v1559
        %v1601 = vsel %vm1598, %v1592, %v1561
        %v1602 = vsel %vm1598, %v1593, %v1563
        %v1603 = vsel %vm1598, %v1594, %v1565
        %v1604 = vsel %vm1598, %v1595, %v1567
        %v1605 = vsel %vm1598, %v1596, %v1569
        %v1606 = vsel %vm1598, %v1597, %v1571
        %vm1607 = vcmask 121856
        %v1608 = vsel %vm1607, %v1599, 0.0
        %v1609 = vsel %vm1607, %v1600, 0.0
        %v1610 = vsel %vm1607, %v1601, 0.0
        %v1611 = vsel %vm1607, %v1602, 0.0
        %v1612 = vsel %vm1607, %v1603, 0.0
        %v1613 = vsel %vm1607, %v1604, 0.0
        %v1614 = vsel %vm1607, %v1605, 0.0
        %v1615 = vsel %vm1607, %v1606, 0.0
        %1616 = vst [vmem:[%s244] sm:$0xff] %v1608
        %1617 = vst [vmem:[%s244 + $0x8] sm:$0xff] %v1609
        %1618 = vst [vmem:[%s244 + $0x10] sm:$0xff] %v1610
        %1619 = vst [vmem:[%s244 + $0x18] sm:$0xff] %v1611
        %1620 = vst [vmem:[%s244 + $0x20] sm:$0xff] %v1612
        %1621 = vst [vmem:[%s244 + $0x28] sm:$0xff] %v1613
        %1622 = vst [vmem:[%s244 + $0x30] sm:$0xff] %v1614
        %1623 = vst [vmem:[%s244 + $0x38] sm:$0xff] %v1615
        %s1624 = sand.u32 %s159, 1
        %s1625 = scalar_lea.sflag [#allocation4], %s1624
        %s1626 = sand.u32 %s159, 1
        %s1627 = smul.addr %s1626, 64
        %s1628 = scalar_lea.vmem [#allocation3], %s1627
        // Predicated region
        $region45: #{tpu_custom_call.1} parent=43 // pred_check
          %p1629 = pneg %p169
        $region46: #{tpu_custom_call.1} parent=43 // pred_check_branch
          %1631 = sbr.rel (%p1629) target = $region48
        $region47: #{tpu_custom_call.1} parent=43 // pred_region
          %1633 = vsyncadd %s1625, 0
          %s1634 = smul.addr %s20, 8
          %s1635 = smul.addr %s1634, 8
          %s1636 = scalar_lea.hbm %s6, %s1635
          %s1637 = sshll.u32 %s1628, 4
          %s1638 = int_to_ptr.vmem [resolvable:$true] %s1637
          %s1639 = sshll.u32 %s1636, 4
          %s1640 = int_to_ptr.hbm [resolvable:$true] %s1639
          %1645 = dma.vmem_to_hbm [thread:$0]  %s1638, 1024, %s1640, %s1625, 128, 128, 8
        $region48: #{tpu_custom_call.1} parent=43 // pred_fallthru
          _
      $region44: #{tpu_custom_call.1} parent=5 // pred_fallthru
        _
      %p1646 = scmp.le.s32.totalorder 2, %s15
      // Predicated region
      $region49: #{tpu_custom_call.1} parent=5 // pred_check
        %p1647 = pneg %p1646
      $region50: #{tpu_custom_call.1} parent=5 // pred_check_branch
        %1649 = sbr.rel (%p1647) target = $region52
      $region51: #{tpu_custom_call.1} parent=5 // pred_region
        %s1650 = ssub.s32 %s15, 2
        // Predicated region
        $region53: #{tpu_custom_call.1} parent=51 // pred_check
          %p1651 = pneg %p175
        $region54: #{tpu_custom_call.1} parent=51 // pred_check_branch
          %1653 = sbr.rel (%p1651) target = $region56
        $region55: #{tpu_custom_call.1} parent=51 // pred_region
          %s1654 = sand.u32 %s160, 1
          %s1655 = scalar_lea.sflag [#allocation4], %s1654
          %s1656 = sand.u32 %s160, 1
          %s1657 = smul.addr %s1656, 64
          %s1658 = scalar_lea.vmem [#allocation3], %s1657
          %1660 = dma.done %s1655, 1024
        $region56: #{tpu_custom_call.1} parent=51 // pred_fallthru
          _
      $region52: #{tpu_custom_call.1} parent=5 // pred_fallthru
        _
    $region6: #{tpu_custom_call.1} parent=1 // loop_footer
      %s19 = sadd.s32 1, %s15
    $region7: #{tpu_custom_call.1} parent=1 // loop_footer_branch
      %14 = sbr.rel target = $region3
    $region8: #{tpu_custom_call.1} parent=1 // loop_exit
      _
    %1661 = vsyncpa [#allocation4], 1
    %s1662 = scalar_lea.sflag [#allocation4], 1
    %1663 = vsyncpa %s1662, 1

</llo_original>
